<compile_context>
chip_gen: v5e
topology: v5e:2x2
jax: 0.10.0
libtpu: 0.0.40
codegen_flags: <defaults>
</compile_context>

<pallas_src>
import numpy as np
import jax
import jax.numpy as jnp
from jax import lax
from jax.experimental import pallas as pl
from jax.experimental.pallas import tpu as pltpu

N_POWER_ITERS = 10  # fixed count in the reference implementation (independent of `nr`)
_PREC_HI = jax.lax.Precision.HIGHEST  # only for products that feed the final scalar


def _normalize(v):
    # v / ||v||  via a single EUP rsqrt (no VPU divide on the critical path)
    return v * lax.rsqrt(jnp.sum(v * v))


def _sqel_kernel(scal_ref, u_ref, h_ref, x_ref, out_ref):
    """scal_ref: SMEM (2,) = [shift_origin_offset, regularizer]
       u_ref:    VMEM (N, N) unitary U
       h_ref:    VMEM (N, N) max-eigenvalue-shifted Hamiltonian H
       x_ref:    VMEM (N, 1) ground state X of H
       out_ref:  SMEM (1, 1) scalar loss
    """
    U = u_ref[...]
    H = h_ref[...]
    X = x_ref[...]

    # A = U @ H @ U.T ; stoquastic(A) = -|A|
    # Transpose of U is folded into the MXU contraction (contract dim 1 with dim 1).
    UH = jnp.dot(U, H, preferred_element_type=jnp.float32, precision=_PREC_HI)
    A = lax.dot_general(UH, U, (((1,), (1,)), ((), ())),
                        preferred_element_type=jnp.float32, precision=_PREC_HI)
    SUH = -jnp.abs(A)

    # SUx = |U @ X|
    SUx = jnp.abs(jnp.dot(U, X, preferred_element_type=jnp.float32, precision=_PREC_HI))

    # Precompute SUH^2 and SUH^4 (independent matmuls, DEFAULT precision: the power
    # iteration is self-correcting and only needs the dominant-eigenvector direction).
    SUH2 = jnp.dot(SUH, SUH, preferred_element_type=jnp.float32)
    SUH4 = jnp.dot(SUH2, SUH2, preferred_element_type=jnp.float32)

    # Reference loop:  for i in range(10): y = SUH @ y; if i % 4 == 0: y /= ||y||
    # i = 0            -> one application + normalize
    # i = 1..4         -> four applications (= SUH4) + normalize
    # i = 5..8         -> four applications (= SUH4) + normalize
    # i = 9            -> one application
    y = jnp.dot(SUH, SUx, preferred_element_type=jnp.float32)
    y = _normalize(y)
    y = jnp.dot(SUH4, y, preferred_element_type=jnp.float32)
    y = _normalize(y)
    y = jnp.dot(SUH4, y, preferred_element_type=jnp.float32)
    y = _normalize(y)
    y = jnp.dot(SUH, y, preferred_element_type=jnp.float32)

    quasi_sgs = jnp.abs(y) * lax.rsqrt(jnp.sum(y * y))            # (N, 1), |y / ||y|||

    # z feeds the final scalar directly -> keep HIGHEST precision here.
    z = jnp.dot(SUH, quasi_sgs, preferred_element_type=jnp.float32, precision=_PREC_HI)

    dot_qz = jnp.sum(quasi_sgs * z)
    inv_norm_z = lax.rsqrt(jnp.sum(z * z))                        # exact form (not approx)

    offset = scal_ref[0]
    regularizer = scal_ref[1]

    res = -dot_qz + regularizer * (1.0 - jnp.abs(dot_qz * inv_norm_z)) - offset
    out_ref[0, 0] = res


def system_quasi_energy_loss(U, H_shifted, X, shift_origin_offset, nr=2, regularizer=0.0):
    """Pallas-backed equivalent of SystemQuasiEnergyLoss.forward(U, nr, regularizer)."""
    if nr < 1:
        raise ValueError("nr should be positive integer.")
    N = U.shape[0]
    scal = jnp.asarray([shift_origin_offset, regularizer], dtype=jnp.float32)
    x_col = jnp.asarray(X, dtype=jnp.float32).reshape(N, 1)

    # Advisory cost hint: 4 NxN matmuls (UH, A, SUH2, SUH4) + ~6 mat-vecs + elementwise.
    cost = pl.CostEstimate(
        flops=int(4 * 2 * N**3 + 6 * 2 * N**2 + 8 * N**2),
        transcendentals=5,
        bytes_accessed=int((2 * N * N + N + 2) * 4 + 4),
    )

    out = pl.pallas_call(
        _sqel_kernel,
        out_shape=jax.ShapeDtypeStruct((1, 1), jnp.float32),
        in_specs=[
            pl.BlockSpec(memory_space=pltpu.MemorySpace.SMEM),   # scalars
            pl.BlockSpec(memory_space=pltpu.MemorySpace.VMEM),   # U
            pl.BlockSpec(memory_space=pltpu.MemorySpace.VMEM),   # H (shifted)
            pl.BlockSpec(memory_space=pltpu.MemorySpace.VMEM),   # X (N, 1)
        ],
        out_specs=pl.BlockSpec(memory_space=pltpu.MemorySpace.SMEM),
        cost_estimate=cost,
    )(scal, jnp.asarray(U, jnp.float32), jnp.asarray(H_shifted, jnp.float32), x_col)
    return out[0, 0]


def _reference_loss(U, H_shifted, X, shift_origin_offset, regularizer):
    """Plain-numpy reference mirroring the PyTorch math (float32)."""
    U = np.asarray(U, np.float32)
    H = np.asarray(H_shifted, np.float32)
    X = np.asarray(X, np.float32)
    SUx = np.abs(U @ X)
    SUH = -np.abs(U @ H @ U.T)
    y = SUx
    for i in range(N_POWER_ITERS):
        y = SUH @ y
        if i % 4 == 0:
            y = y / np.linalg.norm(y)
    qs = np.abs(y / np.linalg.norm(y))
    z = SUH @ qs
    res = -(qs @ z)
    res += regularizer * (1.0 - np.abs(qs.dot(z) / np.linalg.norm(z)))
    return res - float(shift_origin_offset)


if __name__ == "__main__":
    key = jax.random.PRNGKey(0)
    k1, k2 = jax.random.split(key)
    N = 32  # local Hilbert-space dimension (hidden=32)

    # --- __init__ glue: build a deterministic Hermitian (real symmetric) local Hamiltonian
    M = jax.random.normal(k1, (N, N), dtype=jnp.float32)
    h = 0.5 * (M + M.T)
    E, V = jnp.linalg.eigh(h)
    offset_max = E[-1]                                   # E.max()
    H_shifted = h - offset_max * jnp.eye(N, dtype=jnp.float32)
    shift_origin_offset = offset_max - E[0]              # offset - E.min()
    X = V[:, 0]                                          # ground-state eigenvector

    # Deterministic "unitary" (orthogonal) U via QR
    G = jax.random.normal(k2, (N, N), dtype=jnp.float32)
    U, _ = jnp.linalg.qr(G)

    regularizer = 0.1
    loss = system_quasi_energy_loss(U, H_shifted, X, shift_origin_offset,
                                    nr=2, regularizer=regularizer)
    loss = jax.block_until_ready(loss)

    ref = _reference_loss(np.array(U), np.array(H_shifted), np.array(X),
                          float(shift_origin_offset), regularizer)
    # Tolerance accounts for the sanctioned precision changes (DEFAULT-precision
    # power-iteration products, SUH^4 folding) vs. the strict f32 reference order.
    np.testing.assert_allclose(float(loss), float(ref), rtol=2e-3, atol=2e-2)

    print("KERNEL_OK")
</pallas_src>

<mosaic_0001>
module attributes {stable_mosaic.version = 11 : i64} {
  func.func @_sqel_kernel(%arg0: memref<2xf32, #tpu.memory_space<smem>>, %arg1: memref<32x32xf32, #tpu.memory_space<vmem>>, %arg2: memref<32x32xf32, #tpu.memory_space<vmem>>, %arg3: memref<32x1xf32, #tpu.memory_space<vmem>>, %arg4: memref<1x1xf32, #tpu.memory_space<smem>>) attributes {dimension_semantics = [], scalar_prefetch = 0 : i64, scratch_operands = 0 : i64, tpu.core_type = #tpu.core_type<tc>} {
    %c0 = arith.constant 0 : index
    %c0_0 = arith.constant 0 : index
    %0 = vector.load %arg1[%c0, %c0_0] : memref<32x32xf32, #tpu.memory_space<vmem>>, vector<32x32xf32>
    %c0_1 = arith.constant 0 : index
    %c0_2 = arith.constant 0 : index
    %1 = vector.load %arg2[%c0_1, %c0_2] : memref<32x32xf32, #tpu.memory_space<vmem>>, vector<32x32xf32>
    %c0_3 = arith.constant 0 : index
    %c0_4 = arith.constant 0 : index
    %2 = vector.load %arg3[%c0_3, %c0_4] : memref<32x1xf32, #tpu.memory_space<vmem>>, vector<32x1xf32>
    %cst = arith.constant dense<0.000000e+00> : vector<32x32xf32>
    %3 = tpu.matmul %0, %1, %cst {dimension_numbers = #tpu.dot_dimension_numbers<[1], [0], [0], [1], [0, 0, 1, 1], [], []>, precision = #tpu.contract_precision<fp32>} : vector<32x32xf32>, vector<32x32xf32>, vector<32x32xf32> -> vector<32x32xf32>
    %cst_5 = arith.constant dense<0.000000e+00> : vector<32x32xf32>
    %4 = tpu.matmul %3, %0, %cst_5 {dimension_numbers = #tpu.dot_dimension_numbers<[1], [1], [0], [0], [0, 0, 1, 0], [], []>, precision = #tpu.contract_precision<fp32>} : vector<32x32xf32>, vector<32x32xf32>, vector<32x32xf32> -> vector<32x32xf32>
    %5 = math.absf %4 : vector<32x32xf32>
    %cst_6 = arith.constant 0.000000e+00 : f32
    %6 = vector.broadcast %cst_6 : f32 to vector<32x32xf32>
    %7 = arith.subf %6, %5 : vector<32x32xf32>
    %cst_7 = arith.constant dense<0.000000e+00> : vector<32x1xf32>
    %8 = tpu.matmul %0, %2, %cst_7 {dimension_numbers = #tpu.dot_dimension_numbers<[1], [0], [0], [1], [0, 0, 1, 1], [], []>, precision = #tpu.contract_precision<fp32>} : vector<32x32xf32>, vector<32x1xf32>, vector<32x1xf32> -> vector<32x1xf32>
    %9 = math.absf %8 : vector<32x1xf32>
    %cst_8 = arith.constant dense<0.000000e+00> : vector<32x32xf32>
    %10 = tpu.matmul %7, %7, %cst_8 {dimension_numbers = #tpu.dot_dimension_numbers<[1], [0], [0], [1], [0, 0, 1, 1], [], []>} : vector<32x32xf32>, vector<32x32xf32>, vector<32x32xf32> -> vector<32x32xf32>
    %cst_9 = arith.constant dense<0.000000e+00> : vector<32x32xf32>
    %11 = tpu.matmul %10, %10, %cst_9 {dimension_numbers = #tpu.dot_dimension_numbers<[1], [0], [0], [1], [0, 0, 1, 1], [], []>} : vector<32x32xf32>, vector<32x32xf32>, vector<32x32xf32> -> vector<32x32xf32>
    %cst_10 = arith.constant dense<0.000000e+00> : vector<32x1xf32>
    %12 = tpu.matmul %7, %9, %cst_10 {dimension_numbers = #tpu.dot_dimension_numbers<[1], [0], [0], [1], [0, 0, 1, 1], [], []>} : vector<32x32xf32>, vector<32x1xf32>, vector<32x1xf32> -> vector<32x1xf32>
    %13 = arith.mulf %12, %12 : vector<32x1xf32>
    %14 = vector.shape_cast %13 : vector<32x1xf32> to vector<1x32x1xf32>
    %cst_11 = arith.constant dense<0.000000e+00> : vector<1xf32>
    %15 = vector.multi_reduction <add>, %14, %cst_11 [1, 2] : vector<1x32x1xf32> to vector<1xf32>
    %16 = vector.shape_cast %15 : vector<1xf32> to vector<1x1x1xf32>
    %17 = vector.extract %16[0, 0, 0] : f32 from vector<1x1x1xf32>
    %18 = math.rsqrt %17 : f32
    %19 = vector.broadcast %18 : f32 to vector<32x1xf32>
    %20 = arith.mulf %12, %19 : vector<32x1xf32>
    %cst_12 = arith.constant dense<0.000000e+00> : vector<32x1xf32>
    %21 = tpu.matmul %11, %20, %cst_12 {dimension_numbers = #tpu.dot_dimension_numbers<[1], [0], [0], [1], [0, 0, 1, 1], [], []>} : vector<32x32xf32>, vector<32x1xf32>, vector<32x1xf32> -> vector<32x1xf32>
    %22 = arith.mulf %21, %21 : vector<32x1xf32>
    %23 = vector.shape_cast %22 : vector<32x1xf32> to vector<1x32x1xf32>
    %cst_13 = arith.constant dense<0.000000e+00> : vector<1xf32>
    %24 = vector.multi_reduction <add>, %23, %cst_13 [1, 2] : vector<1x32x1xf32> to vector<1xf32>
    %25 = vector.shape_cast %24 : vector<1xf32> to vector<1x1x1xf32>
    %26 = vector.extract %25[0, 0, 0] : f32 from vector<1x1x1xf32>
    %27 = math.rsqrt %26 : f32
    %28 = vector.broadcast %27 : f32 to vector<32x1xf32>
    %29 = arith.mulf %21, %28 : vector<32x1xf32>
    %cst_14 = arith.constant dense<0.000000e+00> : vector<32x1xf32>
    %30 = tpu.matmul %11, %29, %cst_14 {dimension_numbers = #tpu.dot_dimension_numbers<[1], [0], [0], [1], [0, 0, 1, 1], [], []>} : vector<32x32xf32>, vector<32x1xf32>, vector<32x1xf32> -> vector<32x1xf32>
    %31 = arith.mulf %30, %30 : vector<32x1xf32>
    %32 = vector.shape_cast %31 : vector<32x1xf32> to vector<1x32x1xf32>
    %cst_15 = arith.constant dense<0.000000e+00> : vector<1xf32>
    %33 = vector.multi_reduction <add>, %32, %cst_15 [1, 2] : vector<1x32x1xf32> to vector<1xf32>
    %34 = vector.shape_cast %33 : vector<1xf32> to vector<1x1x1xf32>
    %35 = vector.extract %34[0, 0, 0] : f32 from vector<1x1x1xf32>
    %36 = math.rsqrt %35 : f32
    %37 = vector.broadcast %36 : f32 to vector<32x1xf32>
    %38 = arith.mulf %30, %37 : vector<32x1xf32>
    %cst_16 = arith.constant dense<0.000000e+00> : vector<32x1xf32>
    %39 = tpu.matmul %7, %38, %cst_16 {dimension_numbers = #tpu.dot_dimension_numbers<[1], [0], [0], [1], [0, 0, 1, 1], [], []>} : vector<32x32xf32>, vector<32x1xf32>, vector<32x1xf32> -> vector<32x1xf32>
    %40 = math.absf %39 : vector<32x1xf32>
    %41 = arith.mulf %39, %39 : vector<32x1xf32>
    %42 = vector.shape_cast %41 : vector<32x1xf32> to vector<1x32x1xf32>
    %cst_17 = arith.constant dense<0.000000e+00> : vector<1xf32>
    %43 = vector.multi_reduction <add>, %42, %cst_17 [1, 2] : vector<1x32x1xf32> to vector<1xf32>
    %44 = vector.shape_cast %43 : vector<1xf32> to vector<1x1x1xf32>
    %45 = vector.extract %44[0, 0, 0] : f32 from vector<1x1x1xf32>
    %46 = math.rsqrt %45 : f32
    %47 = vector.broadcast %46 : f32 to vector<32x1xf32>
    %48 = arith.mulf %40, %47 : vector<32x1xf32>
    %cst_18 = arith.constant dense<0.000000e+00> : vector<32x1xf32>
    %49 = tpu.matmul %7, %48, %cst_18 {dimension_numbers = #tpu.dot_dimension_numbers<[1], [0], [0], [1], [0, 0, 1, 1], [], []>, precision = #tpu.contract_precision<fp32>} : vector<32x32xf32>, vector<32x1xf32>, vector<32x1xf32> -> vector<32x1xf32>
    %50 = arith.mulf %48, %49 : vector<32x1xf32>
    %51 = vector.shape_cast %50 : vector<32x1xf32> to vector<1x32x1xf32>
    %cst_19 = arith.constant dense<0.000000e+00> : vector<1xf32>
    %52 = vector.multi_reduction <add>, %51, %cst_19 [1, 2] : vector<1x32x1xf32> to vector<1xf32>
    %53 = vector.shape_cast %52 : vector<1xf32> to vector<1x1x1xf32>
    %54 = vector.extract %53[0, 0, 0] : f32 from vector<1x1x1xf32>
    %55 = arith.mulf %49, %49 : vector<32x1xf32>
    %56 = vector.shape_cast %55 : vector<32x1xf32> to vector<1x32x1xf32>
    %cst_20 = arith.constant dense<0.000000e+00> : vector<1xf32>
    %57 = vector.multi_reduction <add>, %56, %cst_20 [1, 2] : vector<1x32x1xf32> to vector<1xf32>
    %58 = vector.shape_cast %57 : vector<1xf32> to vector<1x1x1xf32>
    %59 = vector.extract %58[0, 0, 0] : f32 from vector<1x1x1xf32>
    %60 = math.rsqrt %59 : f32
    %c0_21 = arith.constant 0 : index
    %61 = memref.load %arg0[%c0_21] : memref<2xf32, #tpu.memory_space<smem>>
    %c1 = arith.constant 1 : index
    %62 = memref.load %arg0[%c1] : memref<2xf32, #tpu.memory_space<smem>>
    %cst_22 = arith.constant 0.000000e+00 : f32
    %63 = arith.subf %cst_22, %54 : f32
    %64 = arith.mulf %54, %60 : f32
    %65 = math.absf %64 : f32
    %cst_23 = arith.constant 1.000000e+00 : f32
    %66 = arith.subf %cst_23, %65 : f32
    %67 = arith.mulf %62, %66 : f32
    %68 = arith.addf %63, %67 : f32
    %69 = arith.subf %68, %61 : f32
    %c0_24 = arith.constant 0 : index
    %c0_25 = arith.constant 0 : index
    %70 = memref.load %arg4[%c0_24, %c0_25] : memref<1x1xf32, #tpu.memory_space<smem>>
    memref.store %69, %arg4[%c0_24, %c0_25] : memref<1x1xf32, #tpu.memory_space<smem>>
    return
  }
}

</mosaic_0001>

<llo_original>
// kernel: tpu_custom_call.1
$region0: #{tpu_custom_call.1}
  #allocation0 [shape = 'u32[]', space=smem, size = 0x4, offset = 0x4, fixed_abs, tag = 'smem constant byte address 0x4 - core index']
  #allocation1 [shape = 'u32[72,128]{1,0:T(1,128)}', space=vmem, size = 0x9000, scoped, tag = 'internal scratch']
  %s0 = inlined_call_operand.vmem [shape: f32[2], index: 0, kind: input, shape index: {}]
  %s1 = inlined_call_operand.vmem [shape: f32[32,32], index: 1, kind: input, shape index: {}]
  %s2 = inlined_call_operand.hbm [shape: f32[32,32], index: 2, kind: input, shape index: {}]
  %s3 = inlined_call_operand.vmem [shape: f32[32,1], index: 3, kind: input, shape index: {}]
  %s4 = inlined_call_operand.hbm [shape: f32[1,1], index: 4, kind: output, shape index: {}]
  %s5 = sld [smem:[#allocation0]]
  $region34: #{tpu_custom_call.1} parent=0
    _
  %s7 = ssub.s32 1, %s5
  %s8 = scalar_select 0, %s7, %s5
  $region1: #{tpu_custom_call.1} parent=0
    #allocation2 [shape = 'u8[512]{0}', space=smem, size = 0x200, scoped, tag = 'input window, operand 0, single buffered']
    #allocation3 [shape = 's32[1]{0}', space=sflag, size = 0x4, scoped, tag = 'scoped memory for tpu_custom_call.1']
    #allocation4 [shape = 's32[1]{0}', space=sflag, size = 0x4, scoped, tag = 'scoped memory for tpu_custom_call.1']
    #allocation5 [shape = 's32[1]{0}', space=sflag, size = 0x4, scoped, tag = 'scoped memory for tpu_custom_call.1']
    #allocation6 [shape = 'u8[16384]{0}', space=vmem, size = 0x4000, scoped, tag = 'input window, operand 2, single buffered']
    #allocation7 [shape = 'u8[512]{0}', space=smem, size = 0x200, scoped, tag = 'output window, operand 0, single buffered']
    %9 = vsyncpa [#allocation5], 0
    %10 = vsyncpa [#allocation3], 0
    %11 = vsyncpa [#allocation4], 0
    // Predicated region
    $region2: #{tpu_custom_call.1} parent=1 // pred_check
      _
    $region3: #{tpu_custom_call.1} parent=1 // pred_check_branch
      %13 = sbr.rel (0) target = $region5
    $region4: #{tpu_custom_call.1} parent=1 // pred_region
      %15 = vsyncadd [#allocation5], 0
      %s17 = sshll.u32 %s0, 4
      %s18 = int_to_ptr.vmem [resolvable:$true] %s17
      %20 = dma.vmem_to_smem %s18, 16, [#allocation2], [#allocation5]
    $region5: #{tpu_custom_call.1} parent=1 // pred_fallthru
      _
    // Predicated region
    $region6: #{tpu_custom_call.1} parent=1 // pred_check
      _
    $region7: #{tpu_custom_call.1} parent=1 // pred_check_branch
      %22 = sbr.rel (0) target = $region9
    $region8: #{tpu_custom_call.1} parent=1 // pred_region
      _
    $region9: #{tpu_custom_call.1} parent=1 // pred_fallthru
      _
    // Predicated region
    $region10: #{tpu_custom_call.1} parent=1 // pred_check
      _
    $region11: #{tpu_custom_call.1} parent=1 // pred_check_branch
      %24 = sbr.rel (0) target = $region13
    $region12: #{tpu_custom_call.1} parent=1 // pred_region
      %26 = vsyncadd [#allocation3], 0
      %s27 = sshll.u32 %s2, 4
      %s28 = int_to_ptr.hbm [resolvable:$true] %s27
      %s29 = sshll.u32 [#allocation6], 4
      %s30 = int_to_ptr.vmem [resolvable:$true] %s29
      %35 = dma.hbm_to_vmem [thread:$0]  %s28, 512, %s30, [#allocation3], 128, 128, 8
    $region13: #{tpu_custom_call.1} parent=1 // pred_fallthru
      _
    // Predicated region
    $region14: #{tpu_custom_call.1} parent=1 // pred_check
      _
    $region15: #{tpu_custom_call.1} parent=1 // pred_check_branch
      %37 = sbr.rel (0) target = $region17
    $region16: #{tpu_custom_call.1} parent=1 // pred_region
      _
    $region17: #{tpu_custom_call.1} parent=1 // pred_fallthru
      _
    // Predicated region
    $region18: #{tpu_custom_call.1} parent=1 // pred_check
      _
    $region19: #{tpu_custom_call.1} parent=1 // pred_check_branch
      %39 = sbr.rel (0) target = $region21
    $region20: #{tpu_custom_call.1} parent=1 // pred_region
      %41 = dma.done [#allocation5], 16
    $region21: #{tpu_custom_call.1} parent=1 // pred_fallthru
      _
    // Predicated region
    $region22: #{tpu_custom_call.1} parent=1 // pred_check
      _
    $region23: #{tpu_custom_call.1} parent=1 // pred_check_branch
      %43 = sbr.rel (0) target = $region25
    $region24: #{tpu_custom_call.1} parent=1 // pred_region
      %45 = dma.done [#allocation3], 512
    $region25: #{tpu_custom_call.1} parent=1 // pred_fallthru
      _
    %46 = sfence
    %v47 = vld [vmem:[%s1] sm:$0xff]
    %v48 = vld [vmem:[%s1 + $0x8] sm:$0xff]
    %v49 = vld [vmem:[%s1 + $0x10] sm:$0xff]
    %v50 = vld [vmem:[%s1 + $0x18] sm:$0xff]
    %v51 = vld [vmem:[#allocation6] sm:$0xff]
    %v52 = vld [vmem:[#allocation6 + $0x8] sm:$0xff]
    %v53 = vld [vmem:[#allocation6 + $0x10] sm:$0xff]
    %v54 = vld [vmem:[#allocation6 + $0x18] sm:$0xff]
    %v55 = vld [vmem:[%s3] sm:$0xff]
    %v56 = vld [vmem:[%s3 + $0x8] sm:$0xff]
    %v57 = vld [vmem:[%s3 + $0x10] sm:$0xff]
    %v58 = vld [vmem:[%s3 + $0x18] sm:$0xff]
    %vm59 = vcmask 261120
    %v61 = vsel %vm59, %v47, 0
    %v64 = vsel %vm59, %v48, 0
    %v67 = vsel %vm59, %v49, 0
    %v70 = vsel %vm59, %v50, 0
    %72 = vmatpush.msra.mxu0 0.0
    %73 = vmatpush.msra.mxu0 0.0
    %74 = vmatpush.msra.mxu0 0.0
    %75 = vmatpush.msra.mxu0 0.0
    %76 = vmatpush.msra.mxu0 0.0
    %77 = vmatpush.msra.mxu0 0.0
    %78 = vmatpush.msra.mxu0 0.0
    %79 = vmatpush.msra.mxu0 0.0
    %80 = vmatpush.msra.mxu0 0.0
    %81 = vmatpush.msra.mxu0 0.0
    %82 = vmatpush.msra.mxu0 0.0
    %83 = vmatpush.msra.mxu0 0.0
    %v84 = vand.u32 %v54, 4294901760
    %85 = vmatpush.msra.mxu0 %v84
    %v86 = vand.u32 %v53, 4294901760
    %87 = vmatpush.msra.mxu0 %v86
    %v88 = vand.u32 %v52, 4294901760
    %89 = vmatpush.msra.mxu0 %v88
    %v90 = vand.u32 %v51, 4294901760
    %91 = vmatpush.msra.mxu0 %v90
    %v92 = vand.u32 %v61, 4294901760
    %v93 = vsub.f32 %v61, %v92
    %v94 = vand.u32 %v93, 4294901760
    %v95 = vsub.f32 %v93, %v94
    %v96 = vand.u32 %v95, 4294901760
    %97 = vmatmul.f32.gmra.mxu0 %v96
    %v98 = vpop.f32.mrf.mxu0
    %v99 = vadd.f32 0.0, %v98
    %v100 = vand.u32 %v64, 4294901760
    %v101 = vsub.f32 %v64, %v100
    %v102 = vand.u32 %v101, 4294901760
    %v103 = vsub.f32 %v101, %v102
    %v104 = vand.u32 %v103, 4294901760
    %105 = vmatmul.f32.gmra.mxu0 %v104
    %v106 = vpop.f32.mrf.mxu0
    %v107 = vadd.f32 0.0, %v106
    %v108 = vand.u32 %v67, 4294901760
    %v109 = vsub.f32 %v67, %v108
    %v110 = vand.u32 %v109, 4294901760
    %v111 = vsub.f32 %v109, %v110
    %v112 = vand.u32 %v111, 4294901760
    %113 = vmatmul.f32.gmra.mxu0 %v112
    %v114 = vpop.f32.mrf.mxu0
    %v115 = vadd.f32 0.0, %v114
    %v116 = vand.u32 %v70, 4294901760
    %v117 = vsub.f32 %v70, %v116
    %v118 = vand.u32 %v117, 4294901760
    %v119 = vsub.f32 %v117, %v118
    %v120 = vand.u32 %v119, 4294901760
    %121 = vmatmul.f32.gmra.mxu0 %v120
    %v122 = vpop.f32.mrf.mxu0
    %v123 = vadd.f32 0.0, %v122
    %124 = vdwg.mxu0
    %125 = vmatpush.msra.mxu0 0.0
    %126 = vmatpush.msra.mxu0 0.0
    %127 = vmatpush.msra.mxu0 0.0
    %128 = vmatpush.msra.mxu0 0.0
    %129 = vmatpush.msra.mxu0 0.0
    %130 = vmatpush.msra.mxu0 0.0
    %131 = vmatpush.msra.mxu0 0.0
    %132 = vmatpush.msra.mxu0 0.0
    %133 = vmatpush.msra.mxu0 0.0
    %134 = vmatpush.msra.mxu0 0.0
    %135 = vmatpush.msra.mxu0 0.0
    %136 = vmatpush.msra.mxu0 0.0
    %v137 = vand.u32 %v54, 4294901760
    %v138 = vsub.f32 %v54, %v137
    %v139 = vand.u32 %v138, 4294901760
    %v140 = vsub.f32 %v138, %v139
    %v141 = vand.u32 %v140, 4294901760
    %142 = vmatpush.msra.mxu0 %v141
    %v143 = vand.u32 %v53, 4294901760
    %v144 = vsub.f32 %v53, %v143
    %v145 = vand.u32 %v144, 4294901760
    %v146 = vsub.f32 %v144, %v145
    %v147 = vand.u32 %v146, 4294901760
    %148 = vmatpush.msra.mxu0 %v147
    %v149 = vand.u32 %v52, 4294901760
    %v150 = vsub.f32 %v52, %v149
    %v151 = vand.u32 %v150, 4294901760
    %v152 = vsub.f32 %v150, %v151
    %v153 = vand.u32 %v152, 4294901760
    %154 = vmatpush.msra.mxu0 %v153
    %v155 = vand.u32 %v51, 4294901760
    %v156 = vsub.f32 %v51, %v155
    %v157 = vand.u32 %v156, 4294901760
    %v158 = vsub.f32 %v156, %v157
    %v159 = vand.u32 %v158, 4294901760
    %160 = vmatpush.msra.mxu0 %v159
    %v161 = vand.u32 %v61, 4294901760
    %162 = vmatmul.f32.gmra.mxu0 %v161
    %v163 = vpop.f32.mrf.mxu0
    %v164 = vadd.f32 %v99, %v163
    %v165 = vand.u32 %v64, 4294901760
    %166 = vmatmul.f32.gmra.mxu0 %v165
    %v167 = vpop.f32.mrf.mxu0
    %v168 = vadd.f32 %v107, %v167
    %v169 = vand.u32 %v67, 4294901760
    %170 = vmatmul.f32.gmra.mxu0 %v169
    %v171 = vpop.f32.mrf.mxu0
    %v172 = vadd.f32 %v115, %v171
    %v173 = vand.u32 %v70, 4294901760
    %174 = vmatmul.f32.gmra.mxu0 %v173
    %v175 = vpop.f32.mrf.mxu0
    %v176 = vadd.f32 %v123, %v175
    %177 = vdwg.mxu0
    %178 = vmatpush.msra.mxu0 0.0
    %179 = vmatpush.msra.mxu0 0.0
    %180 = vmatpush.msra.mxu0 0.0
    %181 = vmatpush.msra.mxu0 0.0
    %182 = vmatpush.msra.mxu0 0.0
    %183 = vmatpush.msra.mxu0 0.0
    %184 = vmatpush.msra.mxu0 0.0
    %185 = vmatpush.msra.mxu0 0.0
    %186 = vmatpush.msra.mxu0 0.0
    %187 = vmatpush.msra.mxu0 0.0
    %188 = vmatpush.msra.mxu0 0.0
    %189 = vmatpush.msra.mxu0 0.0
    %v190 = vand.u32 %v54, 4294901760
    %v191 = vsub.f32 %v54, %v190
    %192 = vmatpush.msra.mxu0 %v191
    %v193 = vand.u32 %v53, 4294901760
    %v194 = vsub.f32 %v53, %v193
    %195 = vmatpush.msra.mxu0 %v194
    %v196 = vand.u32 %v52, 4294901760
    %v197 = vsub.f32 %v52, %v196
    %198 = vmatpush.msra.mxu0 %v197
    %v199 = vand.u32 %v51, 4294901760
    %v200 = vsub.f32 %v51, %v199
    %201 = vmatpush.msra.mxu0 %v200
    %v202 = vand.u32 %v61, 4294901760
    %v203 = vsub.f32 %v61, %v202
    %204 = vmatmul.f32.gmra.mxu0 %v203
    %v205 = vpop.f32.mrf.mxu0
    %v206 = vadd.f32 %v164, %v205
    %v207 = vand.u32 %v64, 4294901760
    %v208 = vsub.f32 %v64, %v207
    %209 = vmatmul.f32.gmra.mxu0 %v208
    %v210 = vpop.f32.mrf.mxu0
    %v211 = vadd.f32 %v168, %v210
    %v212 = vand.u32 %v67, 4294901760
    %v213 = vsub.f32 %v67, %v212
    %214 = vmatmul.f32.gmra.mxu0 %v213
    %v215 = vpop.f32.mrf.mxu0
    %v216 = vadd.f32 %v172, %v215
    %v217 = vand.u32 %v70, 4294901760
    %v218 = vsub.f32 %v70, %v217
    %219 = vmatmul.f32.gmra.mxu0 %v218
    %v220 = vpop.f32.mrf.mxu0
    %v221 = vadd.f32 %v176, %v220
    %222 = vdwg.mxu0
    %223 = vmatpush.msra.mxu0 0.0
    %224 = vmatpush.msra.mxu0 0.0
    %225 = vmatpush.msra.mxu0 0.0
    %226 = vmatpush.msra.mxu0 0.0
    %227 = vmatpush.msra.mxu0 0.0
    %228 = vmatpush.msra.mxu0 0.0
    %229 = vmatpush.msra.mxu0 0.0
    %230 = vmatpush.msra.mxu0 0.0
    %231 = vmatpush.msra.mxu0 0.0
    %232 = vmatpush.msra.mxu0 0.0
    %233 = vmatpush.msra.mxu0 0.0
    %234 = vmatpush.msra.mxu0 0.0
    %v235 = vand.u32 %v54, 4294901760
    %236 = vmatpush.msra.mxu0 %v235
    %v237 = vand.u32 %v53, 4294901760
    %238 = vmatpush.msra.mxu0 %v237
    %v239 = vand.u32 %v52, 4294901760
    %240 = vmatpush.msra.mxu0 %v239
    %v241 = vand.u32 %v51, 4294901760
    %242 = vmatpush.msra.mxu0 %v241
    %v243 = vand.u32 %v61, 4294901760
    %v244 = vsub.f32 %v61, %v243
    %v245 = vand.u32 %v244, 4294901760
    %246 = vmatmul.f32.gmra.mxu0 %v245
    %v247 = vpop.f32.mrf.mxu0
    %v248 = vadd.f32 %v206, %v247
    %v249 = vand.u32 %v64, 4294901760
    %v250 = vsub.f32 %v64, %v249
    %v251 = vand.u32 %v250, 4294901760
    %252 = vmatmul.f32.gmra.mxu0 %v251
    %v253 = vpop.f32.mrf.mxu0
    %v254 = vadd.f32 %v211, %v253
    %v255 = vand.u32 %v67, 4294901760
    %v256 = vsub.f32 %v67, %v255
    %v257 = vand.u32 %v256, 4294901760
    %258 = vmatmul.f32.gmra.mxu0 %v257
    %v259 = vpop.f32.mrf.mxu0
    %v260 = vadd.f32 %v216, %v259
    %v261 = vand.u32 %v70, 4294901760
    %v262 = vsub.f32 %v70, %v261
    %v263 = vand.u32 %v262, 4294901760
    %264 = vmatmul.f32.gmra.mxu0 %v263
    %v265 = vpop.f32.mrf.mxu0
    %v266 = vadd.f32 %v221, %v265
    %267 = vdwg.mxu0
    %268 = vmatpush.msra.mxu0 0.0
    %269 = vmatpush.msra.mxu0 0.0
    %270 = vmatpush.msra.mxu0 0.0
    %271 = vmatpush.msra.mxu0 0.0
    %272 = vmatpush.msra.mxu0 0.0
    %273 = vmatpush.msra.mxu0 0.0
    %274 = vmatpush.msra.mxu0 0.0
    %275 = vmatpush.msra.mxu0 0.0
    %276 = vmatpush.msra.mxu0 0.0
    %277 = vmatpush.msra.mxu0 0.0
    %278 = vmatpush.msra.mxu0 0.0
    %279 = vmatpush.msra.mxu0 0.0
    %v280 = vand.u32 %v54, 4294901760
    %v281 = vsub.f32 %v54, %v280
    %v282 = vand.u32 %v281, 4294901760
    %283 = vmatpush.msra.mxu0 %v282
    %v284 = vand.u32 %v53, 4294901760
    %v285 = vsub.f32 %v53, %v284
    %v286 = vand.u32 %v285, 4294901760
    %287 = vmatpush.msra.mxu0 %v286
    %v288 = vand.u32 %v52, 4294901760
    %v289 = vsub.f32 %v52, %v288
    %v290 = vand.u32 %v289, 4294901760
    %291 = vmatpush.msra.mxu0 %v290
    %v292 = vand.u32 %v51, 4294901760
    %v293 = vsub.f32 %v51, %v292
    %v294 = vand.u32 %v293, 4294901760
    %295 = vmatpush.msra.mxu0 %v294
    %v296 = vand.u32 %v61, 4294901760
    %297 = vmatmul.f32.gmra.mxu0 %v296
    %v298 = vpop.f32.mrf.mxu0
    %v299 = vadd.f32 %v248, %v298
    %v300 = vand.u32 %v64, 4294901760
    %301 = vmatmul.f32.gmra.mxu0 %v300
    %v302 = vpop.f32.mrf.mxu0
    %v303 = vadd.f32 %v254, %v302
    %v304 = vand.u32 %v67, 4294901760
    %305 = vmatmul.f32.gmra.mxu0 %v304
    %v306 = vpop.f32.mrf.mxu0
    %v307 = vadd.f32 %v260, %v306
    %v308 = vand.u32 %v70, 4294901760
    %309 = vmatmul.f32.gmra.mxu0 %v308
    %v310 = vpop.f32.mrf.mxu0
    %v311 = vadd.f32 %v266, %v310
    %312 = vdwg.mxu0
    %313 = vmatpush.msra.mxu0 0.0
    %314 = vmatpush.msra.mxu0 0.0
    %315 = vmatpush.msra.mxu0 0.0
    %316 = vmatpush.msra.mxu0 0.0
    %317 = vmatpush.msra.mxu0 0.0
    %318 = vmatpush.msra.mxu0 0.0
    %319 = vmatpush.msra.mxu0 0.0
    %320 = vmatpush.msra.mxu0 0.0
    %321 = vmatpush.msra.mxu0 0.0
    %322 = vmatpush.msra.mxu0 0.0
    %323 = vmatpush.msra.mxu0 0.0
    %324 = vmatpush.msra.mxu0 0.0
    %v325 = vand.u32 %v54, 4294901760
    %326 = vmatpush.msra.mxu0 %v325
    %v327 = vand.u32 %v53, 4294901760
    %328 = vmatpush.msra.mxu0 %v327
    %v329 = vand.u32 %v52, 4294901760
    %330 = vmatpush.msra.mxu0 %v329
    %v331 = vand.u32 %v51, 4294901760
    %332 = vmatpush.msra.mxu0 %v331
    %v333 = vand.u32 %v61, 4294901760
    %334 = vmatmul.f32.gmra.mxu0 %v333
    %v335 = vpop.f32.mrf.mxu0
    %v336 = vadd.f32 %v299, %v335
    %v337 = vand.u32 %v64, 4294901760
    %338 = vmatmul.f32.gmra.mxu0 %v337
    %v339 = vpop.f32.mrf.mxu0
    %v340 = vadd.f32 %v303, %v339
    %v341 = vand.u32 %v67, 4294901760
    %342 = vmatmul.f32.gmra.mxu0 %v341
    %v343 = vpop.f32.mrf.mxu0
    %v344 = vadd.f32 %v307, %v343
    %v345 = vand.u32 %v70, 4294901760
    %346 = vmatmul.f32.gmra.mxu0 %v345
    %v347 = vpop.f32.mrf.mxu0
    %v348 = vadd.f32 %v311, %v347
    %349 = vdwg.mxu0
    %v351 = vsel %vm59, %v336, 0
    %v354 = vsel %vm59, %v340, 0
    %v357 = vsel %vm59, %v344, 0
    %v360 = vsel %vm59, %v348, 0
    %362 = vmatpush.xpose.msra.mxu0 0.0
    %363 = vmatpush.xpose.msra.mxu0 0.0
    %364 = vmatpush.xpose.msra.mxu0 0.0
    %365 = vmatpush.xpose.msra.mxu0 0.0
    %366 = vmatpush.xpose.msra.mxu0 0.0
    %367 = vmatpush.xpose.msra.mxu0 0.0
    %368 = vmatpush.xpose.msra.mxu0 0.0
    %369 = vmatpush.xpose.msra.mxu0 0.0
    %370 = vmatpush.xpose.msra.mxu0 0.0
    %371 = vmatpush.xpose.msra.mxu0 0.0
    %372 = vmatpush.xpose.msra.mxu0 0.0
    %373 = vmatpush.xpose.msra.mxu0 0.0
    %v374 = vand.u32 %v70, 4294901760
    %375 = vmatpush.xpose.msra.mxu0 %v374
    %v376 = vand.u32 %v67, 4294901760
    %377 = vmatpush.xpose.msra.mxu0 %v376
    %v378 = vand.u32 %v64, 4294901760
    %379 = vmatpush.xpose.msra.mxu0 %v378
    %v380 = vand.u32 %v61, 4294901760
    %381 = vmatpush.xpose.msra.mxu0 %v380
    %v382 = vand.u32 %v351, 4294901760
    %v383 = vsub.f32 %v351, %v382
    %v384 = vand.u32 %v383, 4294901760
    %v385 = vsub.f32 %v383, %v384
    %v386 = vand.u32 %v385, 4294901760
    %387 = vmatmul.f32.gmra.mxu0 %v386
    %v388 = vpop.f32.mrf.mxu0
    %v389 = vadd.f32 0.0, %v388
    %v390 = vand.u32 %v354, 4294901760
    %v391 = vsub.f32 %v354, %v390
    %v392 = vand.u32 %v391, 4294901760
    %v393 = vsub.f32 %v391, %v392
    %v394 = vand.u32 %v393, 4294901760
    %395 = vmatmul.f32.gmra.mxu0 %v394
    %v396 = vpop.f32.mrf.mxu0
    %v397 = vadd.f32 0.0, %v396
    %v398 = vand.u32 %v357, 4294901760
    %v399 = vsub.f32 %v357, %v398
    %v400 = vand.u32 %v399, 4294901760
    %v401 = vsub.f32 %v399, %v400
    %v402 = vand.u32 %v401, 4294901760
    %403 = vmatmul.f32.gmra.mxu0 %v402
    %v404 = vpop.f32.mrf.mxu0
    %v405 = vadd.f32 0.0, %v404
    %v406 = vand.u32 %v360, 4294901760
    %v407 = vsub.f32 %v360, %v406
    %v408 = vand.u32 %v407, 4294901760
    %v409 = vsub.f32 %v407, %v408
    %v410 = vand.u32 %v409, 4294901760
    %411 = vmatmul.f32.gmra.mxu0 %v410
    %v412 = vpop.f32.mrf.mxu0
    %v413 = vadd.f32 0.0, %v412
    %414 = vdwg.mxu0
    %415 = vmatpush.xpose.msra.mxu0 0.0
    %416 = vmatpush.xpose.msra.mxu0 0.0
    %417 = vmatpush.xpose.msra.mxu0 0.0
    %418 = vmatpush.xpose.msra.mxu0 0.0
    %419 = vmatpush.xpose.msra.mxu0 0.0
    %420 = vmatpush.xpose.msra.mxu0 0.0
    %421 = vmatpush.xpose.msra.mxu0 0.0
    %422 = vmatpush.xpose.msra.mxu0 0.0
    %423 = vmatpush.xpose.msra.mxu0 0.0
    %424 = vmatpush.xpose.msra.mxu0 0.0
    %425 = vmatpush.xpose.msra.mxu0 0.0
    %426 = vmatpush.xpose.msra.mxu0 0.0
    %v427 = vand.u32 %v70, 4294901760
    %v428 = vsub.f32 %v70, %v427
    %v429 = vand.u32 %v428, 4294901760
    %v430 = vsub.f32 %v428, %v429
    %v431 = vand.u32 %v430, 4294901760
    %432 = vmatpush.xpose.msra.mxu0 %v431
    %v433 = vand.u32 %v67, 4294901760
    %v434 = vsub.f32 %v67, %v433
    %v435 = vand.u32 %v434, 4294901760
    %v436 = vsub.f32 %v434, %v435
    %v437 = vand.u32 %v436, 4294901760
    %438 = vmatpush.xpose.msra.mxu0 %v437
    %v439 = vand.u32 %v64, 4294901760
    %v440 = vsub.f32 %v64, %v439
    %v441 = vand.u32 %v440, 4294901760
    %v442 = vsub.f32 %v440, %v441
    %v443 = vand.u32 %v442, 4294901760
    %444 = vmatpush.xpose.msra.mxu0 %v443
    %v445 = vand.u32 %v61, 4294901760
    %v446 = vsub.f32 %v61, %v445
    %v447 = vand.u32 %v446, 4294901760
    %v448 = vsub.f32 %v446, %v447
    %v449 = vand.u32 %v448, 4294901760
    %450 = vmatpush.xpose.msra.mxu0 %v449
    %v451 = vand.u32 %v351, 4294901760
    %452 = vmatmul.f32.gmra.mxu0 %v451
    %v453 = vpop.f32.mrf.mxu0
    %v454 = vadd.f32 %v389, %v453
    %v455 = vand.u32 %v354, 4294901760
    %456 = vmatmul.f32.gmra.mxu0 %v455
    %v457 = vpop.f32.mrf.mxu0
    %v458 = vadd.f32 %v397, %v457
    %v459 = vand.u32 %v357, 4294901760
    %460 = vmatmul.f32.gmra.mxu0 %v459
    %v461 = vpop.f32.mrf.mxu0
    %v462 = vadd.f32 %v405, %v461
    %v463 = vand.u32 %v360, 4294901760
    %464 = vmatmul.f32.gmra.mxu0 %v463
    %v465 = vpop.f32.mrf.mxu0
    %v466 = vadd.f32 %v413, %v465
    %467 = vdwg.mxu0
    %468 = vmatpush.xpose.msra.mxu0 0.0
    %469 = vmatpush.xpose.msra.mxu0 0.0
    %470 = vmatpush.xpose.msra.mxu0 0.0
    %471 = vmatpush.xpose.msra.mxu0 0.0
    %472 = vmatpush.xpose.msra.mxu0 0.0
    %473 = vmatpush.xpose.msra.mxu0 0.0
    %474 = vmatpush.xpose.msra.mxu0 0.0
    %475 = vmatpush.xpose.msra.mxu0 0.0
    %476 = vmatpush.xpose.msra.mxu0 0.0
    %477 = vmatpush.xpose.msra.mxu0 0.0
    %478 = vmatpush.xpose.msra.mxu0 0.0
    %479 = vmatpush.xpose.msra.mxu0 0.0
    %v480 = vand.u32 %v70, 4294901760
    %v481 = vsub.f32 %v70, %v480
    %482 = vmatpush.xpose.msra.mxu0 %v481
    %v483 = vand.u32 %v67, 4294901760
    %v484 = vsub.f32 %v67, %v483
    %485 = vmatpush.xpose.msra.mxu0 %v484
    %v486 = vand.u32 %v64, 4294901760
    %v487 = vsub.f32 %v64, %v486
    %488 = vmatpush.xpose.msra.mxu0 %v487
    %v489 = vand.u32 %v61, 4294901760
    %v490 = vsub.f32 %v61, %v489
    %491 = vmatpush.xpose.msra.mxu0 %v490
    %v492 = vand.u32 %v351, 4294901760
    %v493 = vsub.f32 %v351, %v492
    %494 = vmatmul.f32.gmra.mxu0 %v493
    %v495 = vpop.f32.mrf.mxu0
    %v496 = vadd.f32 %v454, %v495
    %v497 = vand.u32 %v354, 4294901760
    %v498 = vsub.f32 %v354, %v497
    %499 = vmatmul.f32.gmra.mxu0 %v498
    %v500 = vpop.f32.mrf.mxu0
    %v501 = vadd.f32 %v458, %v500
    %v502 = vand.u32 %v357, 4294901760
    %v503 = vsub.f32 %v357, %v502
    %504 = vmatmul.f32.gmra.mxu0 %v503
    %v505 = vpop.f32.mrf.mxu0
    %v506 = vadd.f32 %v462, %v505
    %v507 = vand.u32 %v360, 4294901760
    %v508 = vsub.f32 %v360, %v507
    %509 = vmatmul.f32.gmra.mxu0 %v508
    %v510 = vpop.f32.mrf.mxu0
    %v511 = vadd.f32 %v466, %v510
    %512 = vdwg.mxu0
    %513 = vmatpush.xpose.msra.mxu0 0.0
    %514 = vmatpush.xpose.msra.mxu0 0.0
    %515 = vmatpush.xpose.msra.mxu0 0.0
    %516 = vmatpush.xpose.msra.mxu0 0.0
    %517 = vmatpush.xpose.msra.mxu0 0.0
    %518 = vmatpush.xpose.msra.mxu0 0.0
    %519 = vmatpush.xpose.msra.mxu0 0.0
    %520 = vmatpush.xpose.msra.mxu0 0.0
    %521 = vmatpush.xpose.msra.mxu0 0.0
    %522 = vmatpush.xpose.msra.mxu0 0.0
    %523 = vmatpush.xpose.msra.mxu0 0.0
    %524 = vmatpush.xpose.msra.mxu0 0.0
    %v525 = vand.u32 %v70, 4294901760
    %526 = vmatpush.xpose.msra.mxu0 %v525
    %v527 = vand.u32 %v67, 4294901760
    %528 = vmatpush.xpose.msra.mxu0 %v527
    %v529 = vand.u32 %v64, 4294901760
    %530 = vmatpush.xpose.msra.mxu0 %v529
    %v531 = vand.u32 %v61, 4294901760
    %532 = vmatpush.xpose.msra.mxu0 %v531
    %v533 = vand.u32 %v351, 4294901760
    %v534 = vsub.f32 %v351, %v533
    %v535 = vand.u32 %v534, 4294901760
    %536 = vmatmul.f32.gmra.mxu0 %v535
    %v537 = vpop.f32.mrf.mxu0
    %v538 = vadd.f32 %v496, %v537
    %v539 = vand.u32 %v354, 4294901760
    %v540 = vsub.f32 %v354, %v539
    %v541 = vand.u32 %v540, 4294901760
    %542 = vmatmul.f32.gmra.mxu0 %v541
    %v543 = vpop.f32.mrf.mxu0
    %v544 = vadd.f32 %v501, %v543
    %v545 = vand.u32 %v357, 4294901760
    %v546 = vsub.f32 %v357, %v545
    %v547 = vand.u32 %v546, 4294901760
    %548 = vmatmul.f32.gmra.mxu0 %v547
    %v549 = vpop.f32.mrf.mxu0
    %v550 = vadd.f32 %v506, %v549
    %v551 = vand.u32 %v360, 4294901760
    %v552 = vsub.f32 %v360, %v551
    %v553 = vand.u32 %v552, 4294901760
    %554 = vmatmul.f32.gmra.mxu0 %v553
    %v555 = vpop.f32.mrf.mxu0
    %v556 = vadd.f32 %v511, %v555
    %557 = vdwg.mxu0
    %558 = vmatpush.xpose.msra.mxu0 0.0
    %559 = vmatpush.xpose.msra.mxu0 0.0
    %560 = vmatpush.xpose.msra.mxu0 0.0
    %561 = vmatpush.xpose.msra.mxu0 0.0
    %562 = vmatpush.xpose.msra.mxu0 0.0
    %563 = vmatpush.xpose.msra.mxu0 0.0
    %564 = vmatpush.xpose.msra.mxu0 0.0
    %565 = vmatpush.xpose.msra.mxu0 0.0
    %566 = vmatpush.xpose.msra.mxu0 0.0
    %567 = vmatpush.xpose.msra.mxu0 0.0
    %568 = vmatpush.xpose.msra.mxu0 0.0
    %569 = vmatpush.xpose.msra.mxu0 0.0
    %v570 = vand.u32 %v70, 4294901760
    %v571 = vsub.f32 %v70, %v570
    %v572 = vand.u32 %v571, 4294901760
    %573 = vmatpush.xpose.msra.mxu0 %v572
    %v574 = vand.u32 %v67, 4294901760
    %v575 = vsub.f32 %v67, %v574
    %v576 = vand.u32 %v575, 4294901760
    %577 = vmatpush.xpose.msra.mxu0 %v576
    %v578 = vand.u32 %v64, 4294901760
    %v579 = vsub.f32 %v64, %v578
    %v580 = vand.u32 %v579, 4294901760
    %581 = vmatpush.xpose.msra.mxu0 %v580
    %v582 = vand.u32 %v61, 4294901760
    %v583 = vsub.f32 %v61, %v582
    %v584 = vand.u32 %v583, 4294901760
    %585 = vmatpush.xpose.msra.mxu0 %v584
    %v586 = vand.u32 %v351, 4294901760
    %587 = vmatmul.f32.gmra.mxu0 %v586
    %v588 = vpop.f32.mrf.mxu0
    %v589 = vadd.f32 %v538, %v588
    %v590 = vand.u32 %v354, 4294901760
    %591 = vmatmul.f32.gmra.mxu0 %v590
    %v592 = vpop.f32.mrf.mxu0
    %v593 = vadd.f32 %v544, %v592
    %v594 = vand.u32 %v357, 4294901760
    %595 = vmatmul.f32.gmra.mxu0 %v594
    %v596 = vpop.f32.mrf.mxu0
    %v597 = vadd.f32 %v550, %v596
    %v598 = vand.u32 %v360, 4294901760
    %599 = vmatmul.f32.gmra.mxu0 %v598
    %v600 = vpop.f32.mrf.mxu0
    %v601 = vadd.f32 %v556, %v600
    %602 = vdwg.mxu0
    %603 = vmatpush.xpose.msra.mxu0 0.0
    %604 = vmatpush.xpose.msra.mxu0 0.0
    %605 = vmatpush.xpose.msra.mxu0 0.0
    %606 = vmatpush.xpose.msra.mxu0 0.0
    %607 = vmatpush.xpose.msra.mxu0 0.0
    %608 = vmatpush.xpose.msra.mxu0 0.0
    %609 = vmatpush.xpose.msra.mxu0 0.0
    %610 = vmatpush.xpose.msra.mxu0 0.0
    %611 = vmatpush.xpose.msra.mxu0 0.0
    %612 = vmatpush.xpose.msra.mxu0 0.0
    %613 = vmatpush.xpose.msra.mxu0 0.0
    %614 = vmatpush.xpose.msra.mxu0 0.0
    %v615 = vand.u32 %v70, 4294901760
    %616 = vmatpush.xpose.msra.mxu0 %v615
    %v617 = vand.u32 %v67, 4294901760
    %618 = vmatpush.xpose.msra.mxu0 %v617
    %v619 = vand.u32 %v64, 4294901760
    %620 = vmatpush.xpose.msra.mxu0 %v619
    %v621 = vand.u32 %v61, 4294901760
    %622 = vmatpush.xpose.msra.mxu0 %v621
    %v623 = vand.u32 %v351, 4294901760
    %624 = vmatmul.f32.gmra.mxu0 %v623
    %v625 = vpop.f32.mrf.mxu0
    %v626 = vadd.f32 %v589, %v625
    %v627 = vand.u32 %v354, 4294901760
    %628 = vmatmul.f32.gmra.mxu0 %v627
    %v629 = vpop.f32.mrf.mxu0
    %v630 = vadd.f32 %v593, %v629
    %v631 = vand.u32 %v357, 4294901760
    %632 = vmatmul.f32.gmra.mxu0 %v631
    %v633 = vpop.f32.mrf.mxu0
    %v634 = vadd.f32 %v597, %v633
    %v635 = vand.u32 %v360, 4294901760
    %636 = vmatmul.f32.gmra.mxu0 %v635
    %v637 = vpop.f32.mrf.mxu0
    %v638 = vadd.f32 %v601, %v637
    %639 = vdwg.mxu0
    %v640 = vand.u32 2147483647, %v626
    %v641 = vand.u32 2147483647, %v630
    %v642 = vand.u32 2147483647, %v634
    %v643 = vand.u32 2147483647, %v638
    %v644 = vsub.f32 0.0, %v640
    %v645 = vsub.f32 0.0, %v641
    %v646 = vsub.f32 0.0, %v642
    %v647 = vsub.f32 0.0, %v643
    %648 = vmatpush.msra.mxu0 0.0
    %649 = vmatpush.msra.mxu0 0.0
    %650 = vmatpush.msra.mxu0 0.0
    %651 = vmatpush.msra.mxu0 0.0
    %652 = vmatpush.msra.mxu0 0.0
    %653 = vmatpush.msra.mxu0 0.0
    %654 = vmatpush.msra.mxu0 0.0
    %655 = vmatpush.msra.mxu0 0.0
    %656 = vmatpush.msra.mxu0 0.0
    %657 = vmatpush.msra.mxu0 0.0
    %658 = vmatpush.msra.mxu0 0.0
    %659 = vmatpush.msra.mxu0 0.0
    %v660 = vand.u32 %v58, 4294901760
    %661 = vmatpush.msra.mxu0 %v660
    %v662 = vand.u32 %v57, 4294901760
    %663 = vmatpush.msra.mxu0 %v662
    %v664 = vand.u32 %v56, 4294901760
    %665 = vmatpush.msra.mxu0 %v664
    %v666 = vand.u32 %v55, 4294901760
    %667 = vmatpush.msra.mxu0 %v666
    %v668 = vand.u32 %v61, 4294901760
    %v669 = vsub.f32 %v61, %v668
    %v670 = vand.u32 %v669, 4294901760
    %v671 = vsub.f32 %v669, %v670
    %v672 = vand.u32 %v671, 4294901760
    %673 = vmatmul.f32.gmra.mxu0 %v672
    %v674 = vpop.f32.mrf.mxu0
    %v675 = vadd.f32 0.0, %v674
    %v676 = vand.u32 %v64, 4294901760
    %v677 = vsub.f32 %v64, %v676
    %v678 = vand.u32 %v677, 4294901760
    %v679 = vsub.f32 %v677, %v678
    %v680 = vand.u32 %v679, 4294901760
    %681 = vmatmul.f32.gmra.mxu0 %v680
    %v682 = vpop.f32.mrf.mxu0
    %v683 = vadd.f32 0.0, %v682
    %v684 = vand.u32 %v67, 4294901760
    %v685 = vsub.f32 %v67, %v684
    %v686 = vand.u32 %v685, 4294901760
    %v687 = vsub.f32 %v685, %v686
    %v688 = vand.u32 %v687, 4294901760
    %689 = vmatmul.f32.gmra.mxu0 %v688
    %v690 = vpop.f32.mrf.mxu0
    %v691 = vadd.f32 0.0, %v690
    %v692 = vand.u32 %v70, 4294901760
    %v693 = vsub.f32 %v70, %v692
    %v694 = vand.u32 %v693, 4294901760
    %v695 = vsub.f32 %v693, %v694
    %v696 = vand.u32 %v695, 4294901760
    %697 = vmatmul.f32.gmra.mxu0 %v696
    %v698 = vpop.f32.mrf.mxu0
    %v699 = vadd.f32 0.0, %v698
    %700 = vdwg.mxu0
    %701 = vmatpush.msra.mxu0 0.0
    %702 = vmatpush.msra.mxu0 0.0
    %703 = vmatpush.msra.mxu0 0.0
    %704 = vmatpush.msra.mxu0 0.0
    %705 = vmatpush.msra.mxu0 0.0
    %706 = vmatpush.msra.mxu0 0.0
    %707 = vmatpush.msra.mxu0 0.0
    %708 = vmatpush.msra.mxu0 0.0
    %709 = vmatpush.msra.mxu0 0.0
    %710 = vmatpush.msra.mxu0 0.0
    %711 = vmatpush.msra.mxu0 0.0
    %712 = vmatpush.msra.mxu0 0.0
    %v713 = vand.u32 %v58, 4294901760
    %v714 = vsub.f32 %v58, %v713
    %v715 = vand.u32 %v714, 4294901760
    %v716 = vsub.f32 %v714, %v715
    %v717 = vand.u32 %v716, 4294901760
    %718 = vmatpush.msra.mxu0 %v717
    %v719 = vand.u32 %v57, 4294901760
    %v720 = vsub.f32 %v57, %v719
    %v721 = vand.u32 %v720, 4294901760
    %v722 = vsub.f32 %v720, %v721
    %v723 = vand.u32 %v722, 4294901760
    %724 = vmatpush.msra.mxu0 %v723
    %v725 = vand.u32 %v56, 4294901760
    %v726 = vsub.f32 %v56, %v725
    %v727 = vand.u32 %v726, 4294901760
    %v728 = vsub.f32 %v726, %v727
    %v729 = vand.u32 %v728, 4294901760
    %730 = vmatpush.msra.mxu0 %v729
    %v731 = vand.u32 %v55, 4294901760
    %v732 = vsub.f32 %v55, %v731
    %v733 = vand.u32 %v732, 4294901760
    %v734 = vsub.f32 %v732, %v733
    %v735 = vand.u32 %v734, 4294901760
    %736 = vmatpush.msra.mxu0 %v735
    %v737 = vand.u32 %v61, 4294901760
    %738 = vmatmul.f32.gmra.mxu0 %v737
    %v739 = vpop.f32.mrf.mxu0
    %v740 = vadd.f32 %v675, %v739
    %v741 = vand.u32 %v64, 4294901760
    %742 = vmatmul.f32.gmra.mxu0 %v741
    %v743 = vpop.f32.mrf.mxu0
    %v744 = vadd.f32 %v683, %v743
    %v745 = vand.u32 %v67, 4294901760
    %746 = vmatmul.f32.gmra.mxu0 %v745
    %v747 = vpop.f32.mrf.mxu0
    %v748 = vadd.f32 %v691, %v747
    %v749 = vand.u32 %v70, 4294901760
    %750 = vmatmul.f32.gmra.mxu0 %v749
    %v751 = vpop.f32.mrf.mxu0
    %v752 = vadd.f32 %v699, %v751
    %753 = vdwg.mxu0
    %754 = vmatpush.msra.mxu0 0.0
    %755 = vmatpush.msra.mxu0 0.0
    %756 = vmatpush.msra.mxu0 0.0
    %757 = vmatpush.msra.mxu0 0.0
    %758 = vmatpush.msra.mxu0 0.0
    %759 = vmatpush.msra.mxu0 0.0
    %760 = vmatpush.msra.mxu0 0.0
    %761 = vmatpush.msra.mxu0 0.0
    %762 = vmatpush.msra.mxu0 0.0
    %763 = vmatpush.msra.mxu0 0.0
    %764 = vmatpush.msra.mxu0 0.0
    %765 = vmatpush.msra.mxu0 0.0
    %v766 = vand.u32 %v58, 4294901760
    %v767 = vsub.f32 %v58, %v766
    %768 = vmatpush.msra.mxu0 %v767
    %v769 = vand.u32 %v57, 4294901760
    %v770 = vsub.f32 %v57, %v769
    %771 = vmatpush.msra.mxu0 %v770
    %v772 = vand.u32 %v56, 4294901760
    %v773 = vsub.f32 %v56, %v772
    %774 = vmatpush.msra.mxu0 %v773
    %v775 = vand.u32 %v55, 4294901760
    %v776 = vsub.f32 %v55, %v775
    %777 = vmatpush.msra.mxu0 %v776
    %v778 = vand.u32 %v61, 4294901760
    %v779 = vsub.f32 %v61, %v778
    %780 = vmatmul.f32.gmra.mxu0 %v779
    %v781 = vpop.f32.mrf.mxu0
    %v782 = vadd.f32 %v740, %v781
    %v783 = vand.u32 %v64, 4294901760
    %v784 = vsub.f32 %v64, %v783
    %785 = vmatmul.f32.gmra.mxu0 %v784
    %v786 = vpop.f32.mrf.mxu0
    %v787 = vadd.f32 %v744, %v786
    %v788 = vand.u32 %v67, 4294901760
    %v789 = vsub.f32 %v67, %v788
    %790 = vmatmul.f32.gmra.mxu0 %v789
    %v791 = vpop.f32.mrf.mxu0
    %v792 = vadd.f32 %v748, %v791
    %v793 = vand.u32 %v70, 4294901760
    %v794 = vsub.f32 %v70, %v793
    %795 = vmatmul.f32.gmra.mxu0 %v794
    %v796 = vpop.f32.mrf.mxu0
    %v797 = vadd.f32 %v752, %v796
    %798 = vdwg.mxu0
    %799 = vmatpush.msra.mxu0 0.0
    %800 = vmatpush.msra.mxu0 0.0
    %801 = vmatpush.msra.mxu0 0.0
    %802 = vmatpush.msra.mxu0 0.0
    %803 = vmatpush.msra.mxu0 0.0
    %804 = vmatpush.msra.mxu0 0.0
    %805 = vmatpush.msra.mxu0 0.0
    %806 = vmatpush.msra.mxu0 0.0
    %807 = vmatpush.msra.mxu0 0.0
    %808 = vmatpush.msra.mxu0 0.0
    %809 = vmatpush.msra.mxu0 0.0
    %810 = vmatpush.msra.mxu0 0.0
    %v811 = vand.u32 %v58, 4294901760
    %812 = vmatpush.msra.mxu0 %v811
    %v813 = vand.u32 %v57, 4294901760
    %814 = vmatpush.msra.mxu0 %v813
    %v815 = vand.u32 %v56, 4294901760
    %816 = vmatpush.msra.mxu0 %v815
    %v817 = vand.u32 %v55, 4294901760
    %818 = vmatpush.msra.mxu0 %v817
    %v819 = vand.u32 %v61, 4294901760
    %v820 = vsub.f32 %v61, %v819
    %v821 = vand.u32 %v820, 4294901760
    %822 = vmatmul.f32.gmra.mxu0 %v821
    %v823 = vpop.f32.mrf.mxu0
    %v824 = vadd.f32 %v782, %v823
    %v825 = vand.u32 %v64, 4294901760
    %v826 = vsub.f32 %v64, %v825
    %v827 = vand.u32 %v826, 4294901760
    %828 = vmatmul.f32.gmra.mxu0 %v827
    %v829 = vpop.f32.mrf.mxu0
    %v830 = vadd.f32 %v787, %v829
    %v831 = vand.u32 %v67, 4294901760
    %v832 = vsub.f32 %v67, %v831
    %v833 = vand.u32 %v832, 4294901760
    %834 = vmatmul.f32.gmra.mxu0 %v833
    %v835 = vpop.f32.mrf.mxu0
    %v836 = vadd.f32 %v792, %v835
    %v837 = vand.u32 %v70, 4294901760
    %v838 = vsub.f32 %v70, %v837
    %v839 = vand.u32 %v838, 4294901760
    %840 = vmatmul.f32.gmra.mxu0 %v839
    %v841 = vpop.f32.mrf.mxu0
    %v842 = vadd.f32 %v797, %v841
    %843 = vdwg.mxu0
    %844 = vmatpush.msra.mxu0 0.0
    %845 = vmatpush.msra.mxu0 0.0
    %846 = vmatpush.msra.mxu0 0.0
    %847 = vmatpush.msra.mxu0 0.0
    %848 = vmatpush.msra.mxu0 0.0
    %849 = vmatpush.msra.mxu0 0.0
    %850 = vmatpush.msra.mxu0 0.0
    %851 = vmatpush.msra.mxu0 0.0
    %852 = vmatpush.msra.mxu0 0.0
    %853 = vmatpush.msra.mxu0 0.0
    %854 = vmatpush.msra.mxu0 0.0
    %855 = vmatpush.msra.mxu0 0.0
    %v856 = vand.u32 %v58, 4294901760
    %v857 = vsub.f32 %v58, %v856
    %v858 = vand.u32 %v857, 4294901760
    %859 = vmatpush.msra.mxu0 %v858
    %v860 = vand.u32 %v57, 4294901760
    %v861 = vsub.f32 %v57, %v860
    %v862 = vand.u32 %v861, 4294901760
    %863 = vmatpush.msra.mxu0 %v862
    %v864 = vand.u32 %v56, 4294901760
    %v865 = vsub.f32 %v56, %v864
    %v866 = vand.u32 %v865, 4294901760
    %867 = vmatpush.msra.mxu0 %v866
    %v868 = vand.u32 %v55, 4294901760
    %v869 = vsub.f32 %v55, %v868
    %v870 = vand.u32 %v869, 4294901760
    %871 = vmatpush.msra.mxu0 %v870
    %v872 = vand.u32 %v61, 4294901760
    %873 = vmatmul.f32.gmra.mxu0 %v872
    %v874 = vpop.f32.mrf.mxu0
    %v875 = vadd.f32 %v824, %v874
    %v876 = vand.u32 %v64, 4294901760
    %877 = vmatmul.f32.gmra.mxu0 %v876
    %v878 = vpop.f32.mrf.mxu0
    %v879 = vadd.f32 %v830, %v878
    %v880 = vand.u32 %v67, 4294901760
    %881 = vmatmul.f32.gmra.mxu0 %v880
    %v882 = vpop.f32.mrf.mxu0
    %v883 = vadd.f32 %v836, %v882
    %v884 = vand.u32 %v70, 4294901760
    %885 = vmatmul.f32.gmra.mxu0 %v884
    %v886 = vpop.f32.mrf.mxu0
    %v887 = vadd.f32 %v842, %v886
    %888 = vdwg.mxu0
    %889 = vmatpush.msra.mxu0 0.0
    %890 = vmatpush.msra.mxu0 0.0
    %891 = vmatpush.msra.mxu0 0.0
    %892 = vmatpush.msra.mxu0 0.0
    %893 = vmatpush.msra.mxu0 0.0
    %894 = vmatpush.msra.mxu0 0.0
    %895 = vmatpush.msra.mxu0 0.0
    %896 = vmatpush.msra.mxu0 0.0
    %897 = vmatpush.msra.mxu0 0.0
    %898 = vmatpush.msra.mxu0 0.0
    %899 = vmatpush.msra.mxu0 0.0
    %900 = vmatpush.msra.mxu0 0.0
    %v901 = vand.u32 %v58, 4294901760
    %902 = vmatpush.msra.mxu0 %v901
    %v903 = vand.u32 %v57, 4294901760
    %904 = vmatpush.msra.mxu0 %v903
    %v905 = vand.u32 %v56, 4294901760
    %906 = vmatpush.msra.mxu0 %v905
    %v907 = vand.u32 %v55, 4294901760
    %908 = vmatpush.msra.mxu0 %v907
    %v909 = vand.u32 %v61, 4294901760
    %910 = vmatmul.f32.gmra.mxu0 %v909
    %v911 = vpop.f32.mrf.mxu0
    %v912 = vadd.f32 %v875, %v911
    %v913 = vand.u32 %v64, 4294901760
    %914 = vmatmul.f32.gmra.mxu0 %v913
    %v915 = vpop.f32.mrf.mxu0
    %v916 = vadd.f32 %v879, %v915
    %v917 = vand.u32 %v67, 4294901760
    %918 = vmatmul.f32.gmra.mxu0 %v917
    %v919 = vpop.f32.mrf.mxu0
    %v920 = vadd.f32 %v883, %v919
    %v921 = vand.u32 %v70, 4294901760
    %922 = vmatmul.f32.gmra.mxu0 %v921
    %v923 = vpop.f32.mrf.mxu0
    %v924 = vadd.f32 %v887, %v923
    %925 = vdwg.mxu0
    %v926 = vand.u32 2147483647, %v912
    %v927 = vand.u32 2147483647, %v916
    %v928 = vand.u32 2147483647, %v920
    %v929 = vand.u32 2147483647, %v924
    %v931 = vsel %vm59, %v644, 0
    %v934 = vsel %vm59, %v645, 0
    %v937 = vsel %vm59, %v646, 0
    %v940 = vsel %vm59, %v647, 0
    %942 = vmatpush.msra.mxu0 0.0
    %943 = vmatpush.msra.mxu0 0.0
    %944 = vmatpush.msra.mxu0 0.0
    %945 = vmatpush.msra.mxu0 0.0
    %946 = vmatpush.msra.mxu0 0.0
    %947 = vmatpush.msra.mxu0 0.0
    %948 = vmatpush.msra.mxu0 0.0
    %949 = vmatpush.msra.mxu0 0.0
    %950 = vmatpush.msra.mxu0 0.0
    %951 = vmatpush.msra.mxu0 0.0
    %952 = vmatpush.msra.mxu0 0.0
    %953 = vmatpush.msra.mxu0 0.0
    %954 = vmatpush.msra.mxu0 %v647
    %955 = vmatpush.msra.mxu0 %v646
    %956 = vmatpush.msra.mxu0 %v645
    %957 = vmatpush.msra.mxu0 %v644
    %958 = vmatmul.f32.gmra.mxu0 %v931
    %v959 = vpop.f32.mrf.mxu0
    %v960 = vadd.f32 0.0, %v959
    %961 = vmatmul.f32.gmra.mxu0 %v934
    %v962 = vpop.f32.mrf.mxu0
    %v963 = vadd.f32 0.0, %v962
    %964 = vmatmul.f32.gmra.mxu0 %v937
    %v965 = vpop.f32.mrf.mxu0
    %v966 = vadd.f32 0.0, %v965
    %967 = vmatmul.f32.gmra.mxu0 %v940
    %v968 = vpop.f32.mrf.mxu0
    %v969 = vadd.f32 0.0, %v968
    %970 = vdwg.mxu0
    %v972 = vsel %vm59, %v960, 0
    %v975 = vsel %vm59, %v963, 0
    %v978 = vsel %vm59, %v966, 0
    %v981 = vsel %vm59, %v969, 0
    %983 = vmatpush.msra.mxu0 0.0
    %984 = vmatpush.msra.mxu0 0.0
    %985 = vmatpush.msra.mxu0 0.0
    %986 = vmatpush.msra.mxu0 0.0
    %987 = vmatpush.msra.mxu0 0.0
    %988 = vmatpush.msra.mxu0 0.0
    %989 = vmatpush.msra.mxu0 0.0
    %990 = vmatpush.msra.mxu0 0.0
    %991 = vmatpush.msra.mxu0 0.0
    %992 = vmatpush.msra.mxu0 0.0
    %993 = vmatpush.msra.mxu0 0.0
    %994 = vmatpush.msra.mxu0 0.0
    %995 = vmatpush.msra.mxu0 %v969
    %996 = vmatpush.msra.mxu0 %v966
    %997 = vmatpush.msra.mxu0 %v963
    %998 = vmatpush.msra.mxu0 %v960
    %999 = vmatmul.f32.gmra.mxu0 %v972
    %v1000 = vpop.f32.mrf.mxu0
    %v1001 = vadd.f32 0.0, %v1000
    %1002 = vmatmul.f32.gmra.mxu0 %v975
    %v1003 = vpop.f32.mrf.mxu0
    %v1004 = vadd.f32 0.0, %v1003
    %1005 = vmatmul.f32.gmra.mxu0 %v978
    %v1006 = vpop.f32.mrf.mxu0
    %v1007 = vadd.f32 0.0, %v1006
    %1008 = vmatmul.f32.gmra.mxu0 %v981
    %v1009 = vpop.f32.mrf.mxu0
    %v1010 = vadd.f32 0.0, %v1009
    %1011 = vdwg.mxu0
    %1012 = vmatpush.msra.mxu0 0.0
    %1013 = vmatpush.msra.mxu0 0.0
    %1014 = vmatpush.msra.mxu0 0.0
    %1015 = vmatpush.msra.mxu0 0.0
    %1016 = vmatpush.msra.mxu0 0.0
    %1017 = vmatpush.msra.mxu0 0.0
    %1018 = vmatpush.msra.mxu0 0.0
    %1019 = vmatpush.msra.mxu0 0.0
    %1020 = vmatpush.msra.mxu0 0.0
    %1021 = vmatpush.msra.mxu0 0.0
    %1022 = vmatpush.msra.mxu0 0.0
    %1023 = vmatpush.msra.mxu0 0.0
    %1024 = vmatpush.msra.mxu0 %v929
    %1025 = vmatpush.msra.mxu0 %v928
    %1026 = vmatpush.msra.mxu0 %v927
    %1027 = vmatpush.msra.mxu0 %v926
    %1028 = vmatmul.f32.gmra.mxu0 %v931
    %v1029 = vpop.f32.mrf.mxu0
    %v1030 = vadd.f32 0.0, %v1029
    %1031 = vmatmul.f32.gmra.mxu0 %v934
    %v1032 = vpop.f32.mrf.mxu0
    %v1033 = vadd.f32 0.0, %v1032
    %1034 = vmatmul.f32.gmra.mxu0 %v937
    %v1035 = vpop.f32.mrf.mxu0
    %v1036 = vadd.f32 0.0, %v1035
    %1037 = vmatmul.f32.gmra.mxu0 %v940
    %v1038 = vpop.f32.mrf.mxu0
    %v1039 = vadd.f32 0.0, %v1038
    %1040 = vdwg.mxu0
    %v1041 = vmul.f32 %v1030, %v1030
    %v1042 = vmul.f32 %v1033, %v1033
    %v1043 = vmul.f32 %v1036, %v1036
    %v1044 = vmul.f32 %v1039, %v1039
    %vm1045 = vcmask 7168
    %v1046 = vsel %vm1045, %v1041, 0.0
    %v1047 = vsel %vm1045, %v1042, 0.0
    %v1048 = vadd.f32 %v1046, %v1047
    %v1049 = vsel %vm1045, %v1043, 0.0
    %v1050 = vadd.f32 %v1048, %v1049
    %v1051 = vsel %vm1045, %v1044, 0.0
    %v1052 = vadd.f32 %v1050, %v1051
    %1053 = vadd.xlane.f32.xlu0 %v1052
    %v1054 = vpop.xlane.xlu0 %1053
    %v1055 = vrot.slane %v1054, 4
    %v1056 = vadd.f32 %v1054, %v1055
    %v1057 = vrot.slane %v1056, 2
    %v1058 = vadd.f32 %v1056, %v1057
    %v1059 = vrot.slane %v1058, 1
    %v1060 = vadd.f32 %v1058, %v1059
    %s1061 = vtos %v1060
    %v1062 = vstv %s1061
    %v1063 = vrsqrt.pop %v1062
    %v1064 = vmul.f32 %v1063, %v1062
    %v1065 = vmul.f32 %v1064, %v1063
    %v1066 = vmul.f32 0.5, %v1065
    %v1067 = vsub.f32 1.5, %v1066
    %v1068 = vmul.f32 %v1063, %v1067
    %vm1069 = vweird.f32 %v1062
    %vm1070 = vweird.f32 %v1063
    %vm1071 = vmor %vm1069, %vm1070
    %v1072 = vsel %vm1071, %v1063, %v1068
    %s1073 = vtos %v1072
    %v1074 = vstv %s1073
    %v1075 = vmul.f32 %v1030, %v1074
    %v1076 = vmul.f32 %v1033, %v1074
    %v1077 = vmul.f32 %v1036, %v1074
    %v1078 = vmul.f32 %v1039, %v1074
    %v1080 = vsel %vm59, %v1001, 0
    %v1083 = vsel %vm59, %v1004, 0
    %v1086 = vsel %vm59, %v1007, 0
    %v1089 = vsel %vm59, %v1010, 0
    %1091 = vmatpush.msra.mxu0 0.0
    %1092 = vmatpush.msra.mxu0 0.0
    %1093 = vmatpush.msra.mxu0 0.0
    %1094 = vmatpush.msra.mxu0 0.0
    %1095 = vmatpush.msra.mxu0 0.0
    %1096 = vmatpush.msra.mxu0 0.0
    %1097 = vmatpush.msra.mxu0 0.0
    %1098 = vmatpush.msra.mxu0 0.0
    %1099 = vmatpush.msra.mxu0 0.0
    %1100 = vmatpush.msra.mxu0 0.0
    %1101 = vmatpush.msra.mxu0 0.0
    %1102 = vmatpush.msra.mxu0 0.0
    %1103 = vmatpush.msra.mxu0 %v1078
    %1104 = vmatpush.msra.mxu0 %v1077
    %1105 = vmatpush.msra.mxu0 %v1076
    %1106 = vmatpush.msra.mxu0 %v1075
    %1107 = vmatmul.f32.gmra.mxu0 %v1080
    %v1108 = vpop.f32.mrf.mxu0
    %v1109 = vadd.f32 0.0, %v1108
    %1110 = vmatmul.f32.gmra.mxu0 %v1083
    %v1111 = vpop.f32.mrf.mxu0
    %v1112 = vadd.f32 0.0, %v1111
    %1113 = vmatmul.f32.gmra.mxu0 %v1086
    %v1114 = vpop.f32.mrf.mxu0
    %v1115 = vadd.f32 0.0, %v1114
    %1116 = vmatmul.f32.gmra.mxu0 %v1089
    %v1117 = vpop.f32.mrf.mxu0
    %v1118 = vadd.f32 0.0, %v1117
    %1119 = vdwg.mxu0
    %v1120 = vmul.f32 %v1109, %v1109
    %v1121 = vmul.f32 %v1112, %v1112
    %v1122 = vmul.f32 %v1115, %v1115
    %v1123 = vmul.f32 %v1118, %v1118
    %v1124 = vsel %vm1045, %v1120, 0.0
    %v1125 = vsel %vm1045, %v1121, 0.0
    %v1126 = vadd.f32 %v1124, %v1125
    %v1127 = vsel %vm1045, %v1122, 0.0
    %v1128 = vadd.f32 %v1126, %v1127
    %v1129 = vsel %vm1045, %v1123, 0.0
    %v1130 = vadd.f32 %v1128, %v1129
    %1131 = vadd.xlane.f32.xlu0 %v1130
    %v1132 = vpop.xlane.xlu0 %1131
    %v1133 = vrot.slane %v1132, 4
    %v1134 = vadd.f32 %v1132, %v1133
    %v1135 = vrot.slane %v1134, 2
    %v1136 = vadd.f32 %v1134, %v1135
    %v1137 = vrot.slane %v1136, 1
    %v1138 = vadd.f32 %v1136, %v1137
    %s1139 = vtos %v1138
    %v1140 = vstv %s1139
    %v1141 = vrsqrt.pop %v1140
    %v1142 = vmul.f32 %v1141, %v1140
    %v1143 = vmul.f32 %v1142, %v1141
    %v1144 = vmul.f32 0.5, %v1143
    %v1145 = vsub.f32 1.5, %v1144
    %v1146 = vmul.f32 %v1141, %v1145
    %vm1147 = vweird.f32 %v1140
    %vm1148 = vweird.f32 %v1141
    %vm1149 = vmor %vm1147, %vm1148
    %v1150 = vsel %vm1149, %v1141, %v1146
    %s1151 = vtos %v1150
    %v1152 = vstv %s1151
    %v1153 = vmul.f32 %v1109, %v1152
    %v1154 = vmul.f32 %v1112, %v1152
    %v1155 = vmul.f32 %v1115, %v1152
    %v1156 = vmul.f32 %v1118, %v1152
    %1157 = vmatpush.msra.mxu0 0.0
    %1158 = vmatpush.msra.mxu0 0.0
    %1159 = vmatpush.msra.mxu0 0.0
    %1160 = vmatpush.msra.mxu0 0.0
    %1161 = vmatpush.msra.mxu0 0.0
    %1162 = vmatpush.msra.mxu0 0.0
    %1163 = vmatpush.msra.mxu0 0.0
    %1164 = vmatpush.msra.mxu0 0.0
    %1165 = vmatpush.msra.mxu0 0.0
    %1166 = vmatpush.msra.mxu0 0.0
    %1167 = vmatpush.msra.mxu0 0.0
    %1168 = vmatpush.msra.mxu0 0.0
    %1169 = vmatpush.msra.mxu0 %v1156
    %1170 = vmatpush.msra.mxu0 %v1155
    %1171 = vmatpush.msra.mxu0 %v1154
    %1172 = vmatpush.msra.mxu0 %v1153
    %1173 = vmatmul.f32.gmra.mxu0 %v1080
    %v1174 = vpop.f32.mrf.mxu0
    %v1175 = vadd.f32 0.0, %v1174
    %1176 = vmatmul.f32.gmra.mxu0 %v1083
    %v1177 = vpop.f32.mrf.mxu0
    %v1178 = vadd.f32 0.0, %v1177
    %1179 = vmatmul.f32.gmra.mxu0 %v1086
    %v1180 = vpop.f32.mrf.mxu0
    %v1181 = vadd.f32 0.0, %v1180
    %1182 = vmatmul.f32.gmra.mxu0 %v1089
    %v1183 = vpop.f32.mrf.mxu0
    %v1184 = vadd.f32 0.0, %v1183
    %1185 = vdwg.mxu0
    %v1186 = vmul.f32 %v1175, %v1175
    %v1187 = vmul.f32 %v1178, %v1178
    %v1188 = vmul.f32 %v1181, %v1181
    %v1189 = vmul.f32 %v1184, %v1184
    %v1190 = vsel %vm1045, %v1186, 0.0
    %v1191 = vsel %vm1045, %v1187, 0.0
    %v1192 = vadd.f32 %v1190, %v1191
    %v1193 = vsel %vm1045, %v1188, 0.0
    %v1194 = vadd.f32 %v1192, %v1193
    %v1195 = vsel %vm1045, %v1189, 0.0
    %v1196 = vadd.f32 %v1194, %v1195
    %1197 = vadd.xlane.f32.xlu0 %v1196
    %v1198 = vpop.xlane.xlu0 %1197
    %v1199 = vrot.slane %v1198, 4
    %v1200 = vadd.f32 %v1198, %v1199
    %v1201 = vrot.slane %v1200, 2
    %v1202 = vadd.f32 %v1200, %v1201
    %v1203 = vrot.slane %v1202, 1
    %v1204 = vadd.f32 %v1202, %v1203
    %s1205 = vtos %v1204
    %v1206 = vstv %s1205
    %v1207 = vrsqrt.pop %v1206
    %v1208 = vmul.f32 %v1207, %v1206
    %v1209 = vmul.f32 %v1208, %v1207
    %v1210 = vmul.f32 0.5, %v1209
    %v1211 = vsub.f32 1.5, %v1210
    %v1212 = vmul.f32 %v1207, %v1211
    %vm1213 = vweird.f32 %v1206
    %vm1214 = vweird.f32 %v1207
    %vm1215 = vmor %vm1213, %vm1214
    %v1216 = vsel %vm1215, %v1207, %v1212
    %s1217 = vtos %v1216
    %v1218 = vstv %s1217
    %v1219 = vmul.f32 %v1175, %v1218
    %v1220 = vmul.f32 %v1178, %v1218
    %v1221 = vmul.f32 %v1181, %v1218
    %v1222 = vmul.f32 %v1184, %v1218
    %1223 = vmatpush.msra.mxu0 0.0
    %1224 = vmatpush.msra.mxu0 0.0
    %1225 = vmatpush.msra.mxu0 0.0
    %1226 = vmatpush.msra.mxu0 0.0
    %1227 = vmatpush.msra.mxu0 0.0
    %1228 = vmatpush.msra.mxu0 0.0
    %1229 = vmatpush.msra.mxu0 0.0
    %1230 = vmatpush.msra.mxu0 0.0
    %1231 = vmatpush.msra.mxu0 0.0
    %1232 = vmatpush.msra.mxu0 0.0
    %1233 = vmatpush.msra.mxu0 0.0
    %1234 = vmatpush.msra.mxu0 0.0
    %1235 = vmatpush.msra.mxu0 %v1222
    %1236 = vmatpush.msra.mxu0 %v1221
    %1237 = vmatpush.msra.mxu0 %v1220
    %1238 = vmatpush.msra.mxu0 %v1219
    %1239 = vmatmul.f32.gmra.mxu0 %v931
    %v1240 = vpop.f32.mrf.mxu0
    %v1241 = vadd.f32 0.0, %v1240
    %1242 = vmatmul.f32.gmra.mxu0 %v934
    %v1243 = vpop.f32.mrf.mxu0
    %v1244 = vadd.f32 0.0, %v1243
    %1245 = vmatmul.f32.gmra.mxu0 %v937
    %v1246 = vpop.f32.mrf.mxu0
    %v1247 = vadd.f32 0.0, %v1246
    %1248 = vmatmul.f32.gmra.mxu0 %v940
    %v1249 = vpop.f32.mrf.mxu0
    %v1250 = vadd.f32 0.0, %v1249
    %1251 = vdwg.mxu0
    %v1252 = vand.u32 2147483647, %v1241
    %v1253 = vand.u32 2147483647, %v1244
    %v1254 = vand.u32 2147483647, %v1247
    %v1255 = vand.u32 2147483647, %v1250
    %v1256 = vmul.f32 %v1241, %v1241
    %v1257 = vmul.f32 %v1244, %v1244
    %v1258 = vmul.f32 %v1247, %v1247
    %v1259 = vmul.f32 %v1250, %v1250
    %v1260 = vsel %vm1045, %v1256, 0.0
    %v1261 = vsel %vm1045, %v1257, 0.0
    %v1262 = vadd.f32 %v1260, %v1261
    %v1263 = vsel %vm1045, %v1258, 0.0
    %v1264 = vadd.f32 %v1262, %v1263
    %v1265 = vsel %vm1045, %v1259, 0.0
    %v1266 = vadd.f32 %v1264, %v1265
    %1267 = vadd.xlane.f32.xlu0 %v1266
    %v1268 = vpop.xlane.xlu0 %1267
    %v1269 = vrot.slane %v1268, 4
    %v1270 = vadd.f32 %v1268, %v1269
    %v1271 = vrot.slane %v1270, 2
    %v1272 = vadd.f32 %v1270, %v1271
    %v1273 = vrot.slane %v1272, 1
    %v1274 = vadd.f32 %v1272, %v1273
    %s1275 = vtos %v1274
    %v1276 = vstv %s1275
    %v1277 = vrsqrt.pop %v1276
    %v1278 = vmul.f32 %v1277, %v1276
    %v1279 = vmul.f32 %v1278, %v1277
    %v1280 = vmul.f32 0.5, %v1279
    %v1281 = vsub.f32 1.5, %v1280
    %v1282 = vmul.f32 %v1277, %v1281
    %vm1283 = vweird.f32 %v1276
    %vm1284 = vweird.f32 %v1277
    %vm1285 = vmor %vm1283, %vm1284
    %v1286 = vsel %vm1285, %v1277, %v1282
    %s1287 = vtos %v1286
    %v1288 = vstv %s1287
    %v1289 = vmul.f32 %v1252, %v1288
    %v1290 = vmul.f32 %v1253, %v1288
    %v1291 = vmul.f32 %v1254, %v1288
    %v1292 = vmul.f32 %v1255, %v1288
    %1293 = vmatpush.msra.mxu0 0.0
    %1294 = vmatpush.msra.mxu0 0.0
    %1295 = vmatpush.msra.mxu0 0.0
    %1296 = vmatpush.msra.mxu0 0.0
    %1297 = vmatpush.msra.mxu0 0.0
    %1298 = vmatpush.msra.mxu0 0.0
    %1299 = vmatpush.msra.mxu0 0.0
    %1300 = vmatpush.msra.mxu0 0.0
    %1301 = vmatpush.msra.mxu0 0.0
    %1302 = vmatpush.msra.mxu0 0.0
    %1303 = vmatpush.msra.mxu0 0.0
    %1304 = vmatpush.msra.mxu0 0.0
    %v1305 = vand.u32 %v1292, 4294901760
    %1306 = vmatpush.msra.mxu0 %v1305
    %v1307 = vand.u32 %v1291, 4294901760
    %1308 = vmatpush.msra.mxu0 %v1307
    %v1309 = vand.u32 %v1290, 4294901760
    %1310 = vmatpush.msra.mxu0 %v1309
    %v1311 = vand.u32 %v1289, 4294901760
    %1312 = vmatpush.msra.mxu0 %v1311
    %v1313 = vand.u32 %v931, 4294901760
    %v1314 = vsub.f32 %v931, %v1313
    %v1315 = vand.u32 %v1314, 4294901760
    %v1316 = vsub.f32 %v1314, %v1315
    %v1317 = vand.u32 %v1316, 4294901760
    %1318 = vmatmul.f32.gmra.mxu0 %v1317
    %v1319 = vpop.f32.mrf.mxu0
    %v1320 = vadd.f32 0.0, %v1319
    %v1321 = vand.u32 %v934, 4294901760
    %v1322 = vsub.f32 %v934, %v1321
    %v1323 = vand.u32 %v1322, 4294901760
    %v1324 = vsub.f32 %v1322, %v1323
    %v1325 = vand.u32 %v1324, 4294901760
    %1326 = vmatmul.f32.gmra.mxu0 %v1325
    %v1327 = vpop.f32.mrf.mxu0
    %v1328 = vadd.f32 0.0, %v1327
    %v1329 = vand.u32 %v937, 4294901760
    %v1330 = vsub.f32 %v937, %v1329
    %v1331 = vand.u32 %v1330, 4294901760
    %v1332 = vsub.f32 %v1330, %v1331
    %v1333 = vand.u32 %v1332, 4294901760
    %1334 = vmatmul.f32.gmra.mxu0 %v1333
    %v1335 = vpop.f32.mrf.mxu0
    %v1336 = vadd.f32 0.0, %v1335
    %v1337 = vand.u32 %v940, 4294901760
    %v1338 = vsub.f32 %v940, %v1337
    %v1339 = vand.u32 %v1338, 4294901760
    %v1340 = vsub.f32 %v1338, %v1339
    %v1341 = vand.u32 %v1340, 4294901760
    %1342 = vmatmul.f32.gmra.mxu0 %v1341
    %v1343 = vpop.f32.mrf.mxu0
    %v1344 = vadd.f32 0.0, %v1343
    %1345 = vdwg.mxu0
    %1346 = vmatpush.msra.mxu0 0.0
    %1347 = vmatpush.msra.mxu0 0.0
    %1348 = vmatpush.msra.mxu0 0.0
    %1349 = vmatpush.msra.mxu0 0.0
    %1350 = vmatpush.msra.mxu0 0.0
    %1351 = vmatpush.msra.mxu0 0.0
    %1352 = vmatpush.msra.mxu0 0.0
    %1353 = vmatpush.msra.mxu0 0.0
    %1354 = vmatpush.msra.mxu0 0.0
    %1355 = vmatpush.msra.mxu0 0.0
    %1356 = vmatpush.msra.mxu0 0.0
    %1357 = vmatpush.msra.mxu0 0.0
    %v1358 = vand.u32 %v1292, 4294901760
    %v1359 = vsub.f32 %v1292, %v1358
    %v1360 = vand.u32 %v1359, 4294901760
    %v1361 = vsub.f32 %v1359, %v1360
    %v1362 = vand.u32 %v1361, 4294901760
    %1363 = vmatpush.msra.mxu0 %v1362
    %v1364 = vand.u32 %v1291, 4294901760
    %v1365 = vsub.f32 %v1291, %v1364
    %v1366 = vand.u32 %v1365, 4294901760
    %v1367 = vsub.f32 %v1365, %v1366
    %v1368 = vand.u32 %v1367, 4294901760
    %1369 = vmatpush.msra.mxu0 %v1368
    %v1370 = vand.u32 %v1290, 4294901760
    %v1371 = vsub.f32 %v1290, %v1370
    %v1372 = vand.u32 %v1371, 4294901760
    %v1373 = vsub.f32 %v1371, %v1372
    %v1374 = vand.u32 %v1373, 4294901760
    %1375 = vmatpush.msra.mxu0 %v1374
    %v1376 = vand.u32 %v1289, 4294901760
    %v1377 = vsub.f32 %v1289, %v1376
    %v1378 = vand.u32 %v1377, 4294901760
    %v1379 = vsub.f32 %v1377, %v1378
    %v1380 = vand.u32 %v1379, 4294901760
    %1381 = vmatpush.msra.mxu0 %v1380
    %v1382 = vand.u32 %v931, 4294901760
    %1383 = vmatmul.f32.gmra.mxu0 %v1382
    %v1384 = vpop.f32.mrf.mxu0
    %v1385 = vadd.f32 %v1320, %v1384
    %v1386 = vand.u32 %v934, 4294901760
    %1387 = vmatmul.f32.gmra.mxu0 %v1386
    %v1388 = vpop.f32.mrf.mxu0
    %v1389 = vadd.f32 %v1328, %v1388
    %v1390 = vand.u32 %v937, 4294901760
    %1391 = vmatmul.f32.gmra.mxu0 %v1390
    %v1392 = vpop.f32.mrf.mxu0
    %v1393 = vadd.f32 %v1336, %v1392
    %v1394 = vand.u32 %v940, 4294901760
    %1395 = vmatmul.f32.gmra.mxu0 %v1394
    %v1396 = vpop.f32.mrf.mxu0
    %v1397 = vadd.f32 %v1344, %v1396
    %1398 = vdwg.mxu0
    %1399 = vmatpush.msra.mxu0 0.0
    %1400 = vmatpush.msra.mxu0 0.0
    %1401 = vmatpush.msra.mxu0 0.0
    %1402 = vmatpush.msra.mxu0 0.0
    %1403 = vmatpush.msra.mxu0 0.0
    %1404 = vmatpush.msra.mxu0 0.0
    %1405 = vmatpush.msra.mxu0 0.0
    %1406 = vmatpush.msra.mxu0 0.0
    %1407 = vmatpush.msra.mxu0 0.0
    %1408 = vmatpush.msra.mxu0 0.0
    %1409 = vmatpush.msra.mxu0 0.0
    %1410 = vmatpush.msra.mxu0 0.0
    %v1411 = vand.u32 %v1292, 4294901760
    %v1412 = vsub.f32 %v1292, %v1411
    %1413 = vmatpush.msra.mxu0 %v1412
    %v1414 = vand.u32 %v1291, 4294901760
    %v1415 = vsub.f32 %v1291, %v1414
    %1416 = vmatpush.msra.mxu0 %v1415
    %v1417 = vand.u32 %v1290, 4294901760
    %v1418 = vsub.f32 %v1290, %v1417
    %1419 = vmatpush.msra.mxu0 %v1418
    %v1420 = vand.u32 %v1289, 4294901760
    %v1421 = vsub.f32 %v1289, %v1420
    %1422 = vmatpush.msra.mxu0 %v1421
    %v1423 = vand.u32 %v931, 4294901760
    %v1424 = vsub.f32 %v931, %v1423
    %1425 = vmatmul.f32.gmra.mxu0 %v1424
    %v1426 = vpop.f32.mrf.mxu0
    %v1427 = vadd.f32 %v1385, %v1426
    %v1428 = vand.u32 %v934, 4294901760
    %v1429 = vsub.f32 %v934, %v1428
    %1430 = vmatmul.f32.gmra.mxu0 %v1429
    %v1431 = vpop.f32.mrf.mxu0
    %v1432 = vadd.f32 %v1389, %v1431
    %v1433 = vand.u32 %v937, 4294901760
    %v1434 = vsub.f32 %v937, %v1433
    %1435 = vmatmul.f32.gmra.mxu0 %v1434
    %v1436 = vpop.f32.mrf.mxu0
    %v1437 = vadd.f32 %v1393, %v1436
    %v1438 = vand.u32 %v940, 4294901760
    %v1439 = vsub.f32 %v940, %v1438
    %1440 = vmatmul.f32.gmra.mxu0 %v1439
    %v1441 = vpop.f32.mrf.mxu0
    %v1442 = vadd.f32 %v1397, %v1441
    %1443 = vdwg.mxu0
    %1444 = vmatpush.msra.mxu0 0.0
    %1445 = vmatpush.msra.mxu0 0.0
    %1446 = vmatpush.msra.mxu0 0.0
    %1447 = vmatpush.msra.mxu0 0.0
    %1448 = vmatpush.msra.mxu0 0.0
    %1449 = vmatpush.msra.mxu0 0.0
    %1450 = vmatpush.msra.mxu0 0.0
    %1451 = vmatpush.msra.mxu0 0.0
    %1452 = vmatpush.msra.mxu0 0.0
    %1453 = vmatpush.msra.mxu0 0.0
    %1454 = vmatpush.msra.mxu0 0.0
    %1455 = vmatpush.msra.mxu0 0.0
    %v1456 = vand.u32 %v1292, 4294901760
    %1457 = vmatpush.msra.mxu0 %v1456
    %v1458 = vand.u32 %v1291, 4294901760
    %1459 = vmatpush.msra.mxu0 %v1458
    %v1460 = vand.u32 %v1290, 4294901760
    %1461 = vmatpush.msra.mxu0 %v1460
    %v1462 = vand.u32 %v1289, 4294901760
    %1463 = vmatpush.msra.mxu0 %v1462
    %v1464 = vand.u32 %v931, 4294901760
    %v1465 = vsub.f32 %v931, %v1464
    %v1466 = vand.u32 %v1465, 4294901760
    %1467 = vmatmul.f32.gmra.mxu0 %v1466
    %v1468 = vpop.f32.mrf.mxu0
    %v1469 = vadd.f32 %v1427, %v1468
    %v1470 = vand.u32 %v934, 4294901760
    %v1471 = vsub.f32 %v934, %v1470
    %v1472 = vand.u32 %v1471, 4294901760
    %1473 = vmatmul.f32.gmra.mxu0 %v1472
    %v1474 = vpop.f32.mrf.mxu0
    %v1475 = vadd.f32 %v1432, %v1474
    %v1476 = vand.u32 %v937, 4294901760
    %v1477 = vsub.f32 %v937, %v1476
    %v1478 = vand.u32 %v1477, 4294901760
    %1479 = vmatmul.f32.gmra.mxu0 %v1478
    %v1480 = vpop.f32.mrf.mxu0
    %v1481 = vadd.f32 %v1437, %v1480
    %v1482 = vand.u32 %v940, 4294901760
    %v1483 = vsub.f32 %v940, %v1482
    %v1484 = vand.u32 %v1483, 4294901760
    %1485 = vmatmul.f32.gmra.mxu0 %v1484
    %v1486 = vpop.f32.mrf.mxu0
    %v1487 = vadd.f32 %v1442, %v1486
    %1488 = vdwg.mxu0
    %1489 = vmatpush.msra.mxu0 0.0
    %1490 = vmatpush.msra.mxu0 0.0
    %1491 = vmatpush.msra.mxu0 0.0
    %1492 = vmatpush.msra.mxu0 0.0
    %1493 = vmatpush.msra.mxu0 0.0
    %1494 = vmatpush.msra.mxu0 0.0
    %1495 = vmatpush.msra.mxu0 0.0
    %1496 = vmatpush.msra.mxu0 0.0
    %1497 = vmatpush.msra.mxu0 0.0
    %1498 = vmatpush.msra.mxu0 0.0
    %1499 = vmatpush.msra.mxu0 0.0
    %1500 = vmatpush.msra.mxu0 0.0
    %v1501 = vand.u32 %v1292, 4294901760
    %v1502 = vsub.f32 %v1292, %v1501
    %v1503 = vand.u32 %v1502, 4294901760
    %1504 = vmatpush.msra.mxu0 %v1503
    %v1505 = vand.u32 %v1291, 4294901760
    %v1506 = vsub.f32 %v1291, %v1505
    %v1507 = vand.u32 %v1506, 4294901760
    %1508 = vmatpush.msra.mxu0 %v1507
    %v1509 = vand.u32 %v1290, 4294901760
    %v1510 = vsub.f32 %v1290, %v1509
    %v1511 = vand.u32 %v1510, 4294901760
    %1512 = vmatpush.msra.mxu0 %v1511
    %v1513 = vand.u32 %v1289, 4294901760
    %v1514 = vsub.f32 %v1289, %v1513
    %v1515 = vand.u32 %v1514, 4294901760
    %1516 = vmatpush.msra.mxu0 %v1515
    %v1517 = vand.u32 %v931, 4294901760
    %1518 = vmatmul.f32.gmra.mxu0 %v1517
    %v1519 = vpop.f32.mrf.mxu0
    %v1520 = vadd.f32 %v1469, %v1519
    %v1521 = vand.u32 %v934, 4294901760
    %1522 = vmatmul.f32.gmra.mxu0 %v1521
    %v1523 = vpop.f32.mrf.mxu0
    %v1524 = vadd.f32 %v1475, %v1523
    %v1525 = vand.u32 %v937, 4294901760
    %1526 = vmatmul.f32.gmra.mxu0 %v1525
    %v1527 = vpop.f32.mrf.mxu0
    %v1528 = vadd.f32 %v1481, %v1527
    %v1529 = vand.u32 %v940, 4294901760
    %1530 = vmatmul.f32.gmra.mxu0 %v1529
    %v1531 = vpop.f32.mrf.mxu0
    %v1532 = vadd.f32 %v1487, %v1531
    %1533 = vdwg.mxu0
    %1534 = vmatpush.msra.mxu0 0.0
    %1535 = vmatpush.msra.mxu0 0.0
    %1536 = vmatpush.msra.mxu0 0.0
    %1537 = vmatpush.msra.mxu0 0.0
    %1538 = vmatpush.msra.mxu0 0.0
    %1539 = vmatpush.msra.mxu0 0.0
    %1540 = vmatpush.msra.mxu0 0.0
    %1541 = vmatpush.msra.mxu0 0.0
    %1542 = vmatpush.msra.mxu0 0.0
    %1543 = vmatpush.msra.mxu0 0.0
    %1544 = vmatpush.msra.mxu0 0.0
    %1545 = vmatpush.msra.mxu0 0.0
    %v1546 = vand.u32 %v1292, 4294901760
    %1547 = vmatpush.msra.mxu0 %v1546
    %v1548 = vand.u32 %v1291, 4294901760
    %1549 = vmatpush.msra.mxu0 %v1548
    %v1550 = vand.u32 %v1290, 4294901760
    %1551 = vmatpush.msra.mxu0 %v1550
    %v1552 = vand.u32 %v1289, 4294901760
    %1553 = vmatpush.msra.mxu0 %v1552
    %v1554 = vand.u32 %v931, 4294901760
    %1555 = vmatmul.f32.gmra.mxu0 %v1554
    %v1556 = vpop.f32.mrf.mxu0
    %v1557 = vadd.f32 %v1520, %v1556
    %v1558 = vand.u32 %v934, 4294901760
    %1559 = vmatmul.f32.gmra.mxu0 %v1558
    %v1560 = vpop.f32.mrf.mxu0
    %v1561 = vadd.f32 %v1524, %v1560
    %v1562 = vand.u32 %v937, 4294901760
    %1563 = vmatmul.f32.gmra.mxu0 %v1562
    %v1564 = vpop.f32.mrf.mxu0
    %v1565 = vadd.f32 %v1528, %v1564
    %v1566 = vand.u32 %v940, 4294901760
    %1567 = vmatmul.f32.gmra.mxu0 %v1566
    %v1568 = vpop.f32.mrf.mxu0
    %v1569 = vadd.f32 %v1532, %v1568
    %1570 = vdwg.mxu0
    %v1571 = vmul.f32 %v1289, %v1557
    %v1572 = vmul.f32 %v1290, %v1561
    %v1573 = vmul.f32 %v1291, %v1565
    %v1574 = vmul.f32 %v1292, %v1569
    %v1575 = vsel %vm1045, %v1571, 0.0
    %v1576 = vsel %vm1045, %v1572, 0.0
    %v1577 = vadd.f32 %v1575, %v1576
    %v1578 = vsel %vm1045, %v1573, 0.0
    %v1579 = vadd.f32 %v1577, %v1578
    %v1580 = vsel %vm1045, %v1574, 0.0
    %v1581 = vadd.f32 %v1579, %v1580
    %1582 = vadd.xlane.f32.xlu0 %v1581
    %v1583 = vpop.xlane.xlu0 %1582
    %v1584 = vrot.slane %v1583, 4
    %v1585 = vadd.f32 %v1583, %v1584
    %v1586 = vrot.slane %v1585, 2
    %v1587 = vadd.f32 %v1585, %v1586
    %v1588 = vrot.slane %v1587, 1
    %v1589 = vadd.f32 %v1587, %v1588
    %s1590 = vtos %v1589
    %v1591 = vmul.f32 %v1557, %v1557
    %v1592 = vmul.f32 %v1561, %v1561
    %v1593 = vmul.f32 %v1565, %v1565
    %v1594 = vmul.f32 %v1569, %v1569
    %v1595 = vsel %vm1045, %v1591, 0.0
    %v1596 = vsel %vm1045, %v1592, 0.0
    %v1597 = vadd.f32 %v1595, %v1596
    %v1598 = vsel %vm1045, %v1593, 0.0
    %v1599 = vadd.f32 %v1597, %v1598
    %v1600 = vsel %vm1045, %v1594, 0.0
    %v1601 = vadd.f32 %v1599, %v1600
    %1602 = vadd.xlane.f32.xlu0 %v1601
    %v1603 = vpop.xlane.xlu0 %1602
    %v1604 = vrot.slane %v1603, 4
    %v1605 = vadd.f32 %v1603, %v1604
    %v1606 = vrot.slane %v1605, 2
    %v1607 = vadd.f32 %v1605, %v1606
    %v1608 = vrot.slane %v1607, 1
    %v1609 = vadd.f32 %v1607, %v1608
    %s1610 = vtos %v1609
    %v1611 = vstv %s1610
    %v1612 = vrsqrt.pop %v1611
    %v1613 = vmul.f32 %v1612, %v1611
    %v1614 = vmul.f32 %v1613, %v1612
    %v1615 = vmul.f32 0.5, %v1614
    %v1616 = vsub.f32 1.5, %v1615
    %v1617 = vmul.f32 %v1612, %v1616
    %vm1618 = vweird.f32 %v1611
    %vm1619 = vweird.f32 %v1612
    %vm1620 = vmor %vm1618, %vm1619
    %v1621 = vsel %vm1620, %v1612, %v1617
    %s1622 = vtos %v1621
    %s1623 = sld [smem:[#allocation2]]
    %s1624 = sld [smem:[#allocation2 + $0x1]]
    %s1625 = ssub.f32 0.0, %s1590
    %s1626 = smul.f32 %s1590, %s1622
    %s1627 = sand.u32 2147483647, %s1626
    %s1628 = ssub.f32 1.0, %s1627
    %s1629 = smul.f32 %s1624, %s1628
    %s1630 = sadd.f32 %s1625, %s1629
    %s1631 = ssub.f32 %s1630, %s1623
    %s1632 = scalar_lea.smem [#allocation7], 0
    %1633 = sst [smem:[%s1632]] %s1631
    // Predicated region
    $region26: #{tpu_custom_call.1} parent=1 // pred_check
      _
    $region27: #{tpu_custom_call.1} parent=1 // pred_check_branch
      %1635 = sbr.rel (0) target = $region29
    $region28: #{tpu_custom_call.1} parent=1 // pred_region
      %1637 = vsyncadd [#allocation4], 0
      %s1639 = sshll.u32 %s4, 4
      %s1640 = int_to_ptr.hbm [resolvable:$true] %s1639
      %1642 = dma.smem_to_hbm [#allocation7], 16, %s1640, [#allocation4]
    $region29: #{tpu_custom_call.1} parent=1 // pred_fallthru
      _
    // Predicated region
    $region30: #{tpu_custom_call.1} parent=1 // pred_check
      _
    $region31: #{tpu_custom_call.1} parent=1 // pred_check_branch
      %1644 = sbr.rel (0) target = $region33
    $region32: #{tpu_custom_call.1} parent=1 // pred_region
      %1646 = dma.done [#allocation4], 16
    $region33: #{tpu_custom_call.1} parent=1 // pred_fallthru
      _
    %1647 = sfence
    %1648 = vsyncpa [#allocation3], 1
    %1649 = vsyncpa [#allocation4], 1
    %1650 = vsyncpa [#allocation5], 1

</llo_original>
